<compile_context>
chip_gen: v7x
topology: tpu7x:2x2x1
jax: 0.10.0
libtpu: 0.0.40
codegen_flags: <defaults>
</compile_context>

<pallas_src>
import functools

import numpy as np
import jax
import jax.numpy as jnp
from jax import lax
from jax.experimental import pallas as pl
from jax.experimental.pallas import tpu as pltpu  # noqa: F401  (TPU backend)

EPS_BN = 1e-5


# ----------------------------- Pallas kernels ------------------------------

def _fused_block_kernel(x_ref, rep_ref, nn_ref, wqkv_ref, w1_ref, b1_ref,
                        w2_ref, b2_ref, o_ref, *, nq, nt, knn, c, apply_bn1):
    """One full transformer block, fully VMEM resident.

    x_ref:    (nt, c)   flattened target tokens (nt = B*T_target)
    rep_ref:  (nq, 1)   int32 flat row ids of the fps-selected query tokens
    nn_ref:   (nq, knn) int32 flat row ids of the knn neighbors of each query
    wqkv_ref: (c, 3c)   [wq * 1/sqrt(c) | wk | wv]
    o_ref:    (nq, c)   output query tokens
    """
    x = x_ref[...]                                    # (nt, c)
    rep = rep_ref[...]                                # (nq, 1) int32
    nn = nn_ref[...]                                  # (nq, knn) int32

    tgt_iota = lax.broadcasted_iota(jnp.int32, (nq, nt), 1)

    # --- gather query tokens (pre-BN) via one-hot matmul (no XLA gather) ----
    g_rep = (rep == tgt_iota).astype(jnp.float32)     # (nq, nt) one-hot rows
    xq = jnp.dot(g_rep, x, preferred_element_type=jnp.float32)   # (nq, c)
    skip1 = xq                                        # residual 1 is pre-BN

    # --- normalizer1: training-mode BatchNorm1d over cat([query, target]) ---
    if apply_bn1:
        inv_n = 1.0 / float(nq + nt)
        mean = (jnp.sum(x, axis=0, keepdims=True)
                + jnp.sum(xq, axis=0, keepdims=True)) * inv_n
        var = (jnp.sum((x - mean) ** 2, axis=0, keepdims=True)
               + jnp.sum((xq - mean) ** 2, axis=0, keepdims=True)) * inv_n
        inv_std = lax.rsqrt(var + EPS_BN)
        xt_n = (x - mean) * inv_std
        xq_n = (xq - mean) * inv_std
    else:
        xt_n = x
        xq_n = xq

    # --- merged Q/K/V projection (attention scale folded into Q columns) ----
    wqkv = wqkv_ref[...]                              # (c, 3c)
    p_t = jnp.dot(xt_n, wqkv, preferred_element_type=jnp.float32)   # (nt, 3c)
    q = jnp.dot(xq_n, wqkv[:, :c], preferred_element_type=jnp.float32)  # (nq, c)
    k_t = p_t[:, c:2 * c]                             # (nt, c)
    v_t = p_t[:, 2 * c:]                              # (nt, c)

    # --- scalar_sa attention: masked full softmax over all targets.
    # Equivalent to knn-gather + softmax because each query has exactly `knn`
    # distinct neighbors; non-neighbors get exp(-1e30) == 0.
    mask = nn[:, 0:1] == tgt_iota                     # (nq, nt) bool
    for kk in range(1, knn):
        mask = jnp.logical_or(mask, nn[:, kk:kk + 1] == tgt_iota)

    s = lax.dot_general(q, k_t, (((1,), (1,)), ((), ())),
                        preferred_element_type=jnp.float32)       # (nq, nt)
    s = jnp.where(mask, s, -1e30)
    s = s - jnp.max(s, axis=-1, keepdims=True)
    e = jnp.exp(s)
    a = e * pl.reciprocal(jnp.sum(e, axis=-1, keepdims=True), approx=True)
    attn = jnp.dot(a, v_t, preferred_element_type=jnp.float32)    # (nq, c)

    x1 = attn + skip1                                 # residual 1

    # --- normalizer2 (BN) + MLP (Linear/ReLU/Linear) + residual 2 -----------
    mean2 = jnp.mean(x1, axis=0, keepdims=True)
    var2 = jnp.mean((x1 - mean2) ** 2, axis=0, keepdims=True)
    y = (x1 - mean2) * lax.rsqrt(var2 + EPS_BN)
    h = jnp.dot(y, w1_ref[...], preferred_element_type=jnp.float32) + b1_ref[...]
    h = jnp.maximum(h, 0.0)
    z = jnp.dot(h, w2_ref[...], preferred_element_type=jnp.float32) + b2_ref[...]
    o_ref[...] = z + x1


def fused_block(tokens_target_flat, rep_flat, nn_flat, p, *, nq, nt, knn, c,
                apply_bn1):
    kern = functools.partial(_fused_block_kernel, nq=nq, nt=nt, knn=knn, c=c,
                             apply_bn1=apply_bn1)
    return pl.pallas_call(
        kern,
        out_shape=jax.ShapeDtypeStruct((nq, c), jnp.float32),
    )(tokens_target_flat,
      rep_flat.reshape(nq, 1).astype(jnp.int32),
      nn_flat.reshape(nq, knn).astype(jnp.int32),
      p['wqkv'], p['w1'], p['b1'].reshape(1, -1),
      p['w2'], p['b2'].reshape(1, -1))


def _embed_pool_kernel(x_ref, w_ref, b_ref, o_ref, *, batch, tq):
    # mean over tokens (as an MXU matmul with an in-kernel pooling matrix)
    # -> Linear -> BatchNorm1d -> ReLU.  Output is 128-lane dense.
    x = x_ref[...]                                    # (batch*tq, c)
    row = lax.broadcasted_iota(jnp.int32, (batch, batch * tq), 0)
    col = lax.broadcasted_iota(jnp.int32, (batch, batch * tq), 1)
    lower = row * tq
    in_row = jnp.logical_and(col >= lower, col < lower + tq)
    pool = jnp.where(in_row, jnp.float32(1.0 / tq), jnp.float32(0.0))
    g = jnp.dot(pool, x, preferred_element_type=jnp.float32)      # (batch, c)
    y = jnp.dot(g, w_ref[...], preferred_element_type=jnp.float32) + b_ref[...]
    mean = jnp.mean(y, axis=0, keepdims=True)
    var = jnp.mean((y - mean) ** 2, axis=0, keepdims=True)
    y = (y - mean) * lax.rsqrt(var + EPS_BN)
    o_ref[...] = jnp.maximum(y, 0.0)


def embed_pool(tokens_flat, w, b, *, batch, tq):
    e = w.shape[1]
    kern = functools.partial(_embed_pool_kernel, batch=batch, tq=tq)
    return pl.pallas_call(
        kern,
        out_shape=jax.ShapeDtypeStruct((batch, e), jnp.float32),
    )(tokens_flat, w, b.reshape(1, e))


# ------------------------------ JAX glue ops --------------------------------

def farthest_point_sampling(points, k):
    # TODO(synk): pytorch3d sample_farthest_points uses random_start_point=True;
    # we start deterministically at index 0.
    def one(pts):
        sel0 = jnp.zeros((k,), jnp.int32)
        d0 = jnp.sum((pts - pts[0]) ** 2, axis=-1)

        def body(i, carry):
            sel, dist = carry
            nxt = jnp.argmax(dist).astype(jnp.int32)
            sel = sel.at[i].set(nxt)
            d = jnp.sum((pts - pts[nxt]) ** 2, axis=-1)
            return sel, jnp.minimum(dist, d)

        sel, _ = jax.lax.fori_loop(1, k, body, (sel0, d0))
        return sel

    return jax.vmap(one)(points)


def nn_search(query, target, k):
    # query (B, Tq, 3), target (B, Tt, 3) -> (B, Tq, k) nearest-target indices
    d2 = jnp.sum((query[:, :, None, :] - target[:, None, :, :]) ** 2, axis=-1)
    _, idx = jax.lax.top_k(-d2, k)
    return idx.astype(jnp.int32)


def gather_rows(x, idx):
    # x (B, T, C), idx (B, K) -> (B, K, C)   (tiny: centers / lrfs only)
    return jax.vmap(lambda xb, ib: xb[ib])(x, idx)


# --------------------------- parameter creation ------------------------------

def init_params(key, num_blocks, c, e_dim):
    def uni(k, shape, fan_in):
        bound = 1.0 / float(np.sqrt(fan_in))
        return jax.random.uniform(k, shape, jnp.float32, -bound, bound)

    scale = 1.0 / float(np.sqrt(c))
    params = []
    for _ in range(num_blocks):
        key, *ks = jax.random.split(key, 7)
        wq = uni(ks[0], (c, c), c)                 # to_q (no bias)
        wkv = uni(ks[1], (c, 2 * c), c)            # to_kv (no bias)
        params.append(dict(
            # fold the 1/sqrt(C) attention scale into the Q projection columns
            wqkv=jnp.concatenate([wq * scale, wkv], axis=1),   # (c, 3c)
            w1=uni(ks[2], (c, 2 * c), c),          # mlp Linear 1
            b1=uni(ks[3], (2 * c,), c),
            w2=uni(ks[4], (2 * c, c), 2 * c),      # mlp Linear 2
            b2=uni(ks[5], (c,), 2 * c),
        ))
    key, k1, k2 = jax.random.split(key, 3)
    emb = dict(w=uni(k1, (c, e_dim), c), b=uni(k2, (e_dim,), c))
    return params, emb


# ------------------------------ forward pass ---------------------------------

def token_set_transformer_forward(tokens, centers, lrfs, params, emb_params,
                                  num_center_pts, num_nns):
    B, T, C = tokens.shape
    T_target = T
    centers_target = centers
    lrfs_target = lrfs.reshape(B, T, 9)
    tokens_target = tokens

    for i, (Tq, knn) in enumerate(zip(num_center_pts, num_nns)):
        # --- subsample (fps mode) + knn search (tiny scalar-ish glue) -------
        rep_idx = farthest_point_sampling(centers_target, Tq)      # (B, Tq)
        centers_query = gather_rows(centers_target, rep_idx)       # (B, Tq, 3)
        lrfs_query = gather_rows(lrfs_target, rep_idx)              # (B, Tq, 9)
        nn_idx = nn_search(centers_query, centers_target, knn)     # (B, Tq, knn)

        # flat row ids into the (B*T_target, C) flattened token buffer so the
        # fused kernel can build its one-hot / neighbor masks in-kernel.
        off = jnp.arange(B, dtype=jnp.int32) * T_target
        rep_flat = (rep_idx.astype(jnp.int32) + off[:, None]).reshape(B * Tq)
        nn_flat = (nn_idx + off[:, None, None]).reshape(B * Tq, knn)

        # one fused Pallas kernel per block: BN1 (i>0) -> Q/KV -> attention
        # -> residual -> BN2 -> MLP -> residual.
        x = fused_block(tokens_target.reshape(B * T_target, C),
                        rep_flat, nn_flat, params[i],
                        nq=B * Tq, nt=B * T_target, knn=int(knn), c=C,
                        apply_bn1=(i > 0))                          # (B*Tq, C)

        T_target = Tq
        centers_target = centers_query
        lrfs_target = lrfs_query
        tokens_target = x.reshape(B, Tq, C)

    # mean-pool + embedder (Linear -> BatchNorm1d -> ReLU), fused.
    g = embed_pool(tokens_target.reshape(B * T_target, C),
                   emb_params['w'], emb_params['b'], batch=B, tq=T_target)

    # tu.ksparse(k=64): keep exactly the top-64 activations per row
    # (top-k + scatter, matching PyTorch's exact-k behavior on ties).
    k = min(64, g.shape[1])
    vals, idx = jax.lax.top_k(g, k)
    g = jnp.zeros_like(g).at[jnp.arange(g.shape[0])[:, None], idx].set(vals)

    # F.normalize(dim=1)
    norm = jnp.sqrt(jnp.sum(g * g, axis=1, keepdims=True))
    g = g / jnp.maximum(norm, 1e-12)
    return g


# --------------------------------- main ---------------------------------------

if __name__ == "__main__":
    # args: num_tokens=32, num_dim_token=32, trsfm_num_blocks=2, trsfm_knn=4,
    #       trsfm_attention_mode='scalar_sa', trsfm_subsample_mode='fps',
    #       num_dim_embedding=128
    B, T, C = 2, 32, 32
    num_blocks = 2
    trsfm_knn = 4
    E = 128

    num_center_pts = []
    for i in range(num_blocks):
        nt = int(T // (2 ** (i + 1)))
        if nt <= 8:
            nt = 8
        num_center_pts.append(nt)
    num_nns = []
    for i in range(num_blocks):
        knn = trsfm_knn * (2 ** i)
        if i > 0 and num_center_pts[i - 1] <= knn:
            knn = num_center_pts[i - 1]
        num_nns.append(int(knn))

    key = jax.random.PRNGKey(0)
    k1, k2, k3, k4 = jax.random.split(key, 4)
    tokens = jax.random.normal(k1, (B, T, C), jnp.float32)
    centers = jax.random.normal(k2, (B, T, 3), jnp.float32)
    lrfs = jax.random.normal(k3, (B, T, 3, 3), jnp.float32)
    params, emb_params = init_params(k4, num_blocks, C, E)

    fwd = jax.jit(functools.partial(token_set_transformer_forward,
                                    num_center_pts=num_center_pts,
                                    num_nns=num_nns))
    out = fwd(tokens, centers, lrfs, params, emb_params)
    out = jax.block_until_ready(out)
    assert out.shape == (B, E), out.shape
    assert bool(jnp.all(jnp.isfinite(out)))
    print("KERNEL_OK")
</pallas_src>

<mosaic_0001>
module attributes {stable_mosaic.version = 11 : i64} {
  func.func @_embed_pool_kernel(%arg0: memref<16x32xf32, #tpu.memory_space<vmem>>, %arg1: memref<32x128xf32, #tpu.memory_space<vmem>>, %arg2: memref<1x128xf32, #tpu.memory_space<vmem>>, %arg3: memref<2x128xf32, #tpu.memory_space<vmem>>) attributes {dimension_semantics = [], scalar_prefetch = 0 : i64, scratch_operands = 0 : i64, tpu.core_type = #tpu.core_type<tc>} {
    %c0 = arith.constant 0 : index
    %c0_0 = arith.constant 0 : index
    %0 = vector.load %arg0[%c0, %c0_0] : memref<16x32xf32, #tpu.memory_space<vmem>>, vector<16x32xf32>
    %1 = tpu.iota {dimensions = array<i32: 0>} : vector<2x16xi32>
    %2 = tpu.iota {dimensions = array<i32: 1>} : vector<2x16xi32>
    %c8_i32 = arith.constant 8 : i32
    %3 = vector.broadcast %c8_i32 : i32 to vector<2x16xi32>
    %4 = arith.muli %1, %3 : vector<2x16xi32>
    %5 = arith.cmpi sge, %2, %4 : vector<2x16xi32>
    %c8_i32_1 = arith.constant 8 : i32
    %6 = vector.broadcast %c8_i32_1 : i32 to vector<2x16xi32>
    %7 = arith.addi %4, %6 : vector<2x16xi32>
    %8 = arith.cmpi slt, %2, %7 : vector<2x16xi32>
    %9 = arith.andi %5, %8 : vector<2x16xi1>
    %cst = arith.constant 1.250000e-01 : f32
    %cst_2 = arith.constant 0.000000e+00 : f32
    %10 = vector.broadcast %cst : f32 to vector<2x16xf32>
    %11 = vector.broadcast %cst_2 : f32 to vector<2x16xf32>
    %12 = arith.select %9, %10, %11 : vector<2x16xi1>, vector<2x16xf32>
    %cst_3 = arith.constant dense<0.000000e+00> : vector<2x32xf32>
    %13 = tpu.matmul %12, %0, %cst_3 {dimension_numbers = #tpu.dot_dimension_numbers<[1], [0], [0], [1], [0, 0, 1, 1], [], []>} : vector<2x16xf32>, vector<16x32xf32>, vector<2x32xf32> -> vector<2x32xf32>
    %c0_4 = arith.constant 0 : index
    %c0_5 = arith.constant 0 : index
    %14 = vector.load %arg1[%c0_4, %c0_5] : memref<32x128xf32, #tpu.memory_space<vmem>>, vector<32x128xf32>
    %cst_6 = arith.constant dense<0.000000e+00> : vector<2x128xf32>
    %15 = tpu.matmul %13, %14, %cst_6 {dimension_numbers = #tpu.dot_dimension_numbers<[1], [0], [0], [1], [0, 0, 1, 1], [], []>} : vector<2x32xf32>, vector<32x128xf32>, vector<2x128xf32> -> vector<2x128xf32>
    %c0_7 = arith.constant 0 : index
    %c0_8 = arith.constant 0 : index
    %16 = vector.load %arg2[%c0_7, %c0_8] : memref<1x128xf32, #tpu.memory_space<vmem>>, vector<1x128xf32>
    %17 = vector.broadcast %16 : vector<1x128xf32> to vector<2x128xf32>
    %18 = arith.addf %15, %17 : vector<2x128xf32>
    %cst_9 = arith.constant dense<0.000000e+00> : vector<128xf32>
    %19 = vector.multi_reduction <add>, %18, %cst_9 [0] : vector<2x128xf32> to vector<128xf32>
    %20 = vector.shape_cast %19 : vector<128xf32> to vector<1x128xf32>
    %cst_10 = arith.constant 2.000000e+00 : f32
    %21 = vector.broadcast %cst_10 : f32 to vector<1x128xf32>
    %22 = arith.divf %20, %21 : vector<1x128xf32>
    %23 = vector.broadcast %22 : vector<1x128xf32> to vector<2x128xf32>
    %24 = arith.subf %18, %23 : vector<2x128xf32>
    %25 = arith.mulf %24, %24 : vector<2x128xf32>
    %cst_11 = arith.constant dense<0.000000e+00> : vector<128xf32>
    %26 = vector.multi_reduction <add>, %25, %cst_11 [0] : vector<2x128xf32> to vector<128xf32>
    %27 = vector.shape_cast %26 : vector<128xf32> to vector<1x128xf32>
    %cst_12 = arith.constant 2.000000e+00 : f32
    %28 = vector.broadcast %cst_12 : f32 to vector<1x128xf32>
    %29 = arith.divf %27, %28 : vector<1x128xf32>
    %30 = vector.broadcast %22 : vector<1x128xf32> to vector<2x128xf32>
    %31 = arith.subf %18, %30 : vector<2x128xf32>
    %cst_13 = arith.constant 9.99999974E-6 : f32
    %32 = vector.broadcast %cst_13 : f32 to vector<1x128xf32>
    %33 = arith.addf %29, %32 : vector<1x128xf32>
    %34 = math.rsqrt %33 : vector<1x128xf32>
    %35 = vector.broadcast %34 : vector<1x128xf32> to vector<2x128xf32>
    %36 = arith.mulf %31, %35 : vector<2x128xf32>
    %cst_14 = arith.constant 0.000000e+00 : f32
    %37 = vector.broadcast %cst_14 : f32 to vector<2x128xf32>
    %38 = arith.maximumf %36, %37 : vector<2x128xf32>
    %c0_15 = arith.constant 0 : index
    %c0_16 = arith.constant 0 : index
    %39 = vector.load %arg3[%c0_15, %c0_16] : memref<2x128xf32, #tpu.memory_space<vmem>>, vector<2x128xf32>
    tpu.vector_store %arg3[%c0_15, %c0_16], %38 {strides = array<i32>} : memref<2x128xf32, #tpu.memory_space<vmem>>, vector<2x128xf32>,
    return
  }
}

module attributes {stable_mosaic.version = 11 : i64} {
  func.func @_fused_block_kernel(%arg0: memref<64x32xf32, #tpu.memory_space<vmem>>, %arg1: memref<32x1xi32, #tpu.memory_space<vmem>>, %arg2: memref<32x4xi32, #tpu.memory_space<vmem>>, %arg3: memref<32x96xf32, #tpu.memory_space<vmem>>, %arg4: memref<32x64xf32, #tpu.memory_space<vmem>>, %arg5: memref<1x64xf32, #tpu.memory_space<vmem>>, %arg6: memref<64x32xf32, #tpu.memory_space<vmem>>, %arg7: memref<1x32xf32, #tpu.memory_space<vmem>>, %arg8: memref<32x32xf32, #tpu.memory_space<vmem>>) attributes {dimension_semantics = [], scalar_prefetch = 0 : i64, scratch_operands = 0 : i64, tpu.core_type = #tpu.core_type<tc>} {
    %c0 = arith.constant 0 : index
    %c0_0 = arith.constant 0 : index
    %0 = vector.load %arg0[%c0, %c0_0] : memref<64x32xf32, #tpu.memory_space<vmem>>, vector<64x32xf32>
    %c0_1 = arith.constant 0 : index
    %c0_2 = arith.constant 0 : index
    %1 = vector.load %arg1[%c0_1, %c0_2] : memref<32x1xi32, #tpu.memory_space<vmem>>, vector<32x1xi32>
    %c0_3 = arith.constant 0 : index
    %c0_4 = arith.constant 0 : index
    %2 = vector.load %arg2[%c0_3, %c0_4] : memref<32x4xi32, #tpu.memory_space<vmem>>, vector<32x4xi32>
    %3 = tpu.iota {dimensions = array<i32: 1>} : vector<32x64xi32>
    %4 = vector.broadcast %1 : vector<32x1xi32> to vector<32x64xi32>
    %5 = arith.cmpi eq, %4, %3 : vector<32x64xi32>
    %6 = arith.extui %5 : vector<32x64xi1> to vector<32x64xi32>
    %7 = arith.sitofp %6 : vector<32x64xi32> to vector<32x64xf32>
    %cst = arith.constant dense<0.000000e+00> : vector<32x32xf32>
    %8 = tpu.matmul %7, %0, %cst {dimension_numbers = #tpu.dot_dimension_numbers<[1], [0], [0], [1], [0, 0, 1, 1], [], []>} : vector<32x64xf32>, vector<64x32xf32>, vector<32x32xf32> -> vector<32x32xf32>
    %c0_5 = arith.constant 0 : index
    %c0_6 = arith.constant 0 : index
    %9 = vector.load %arg3[%c0_5, %c0_6] : memref<32x96xf32, #tpu.memory_space<vmem>>, vector<32x96xf32>
    %cst_7 = arith.constant dense<0.000000e+00> : vector<64x96xf32>
    %10 = tpu.matmul %0, %9, %cst_7 {dimension_numbers = #tpu.dot_dimension_numbers<[1], [0], [0], [1], [0, 0, 1, 1], [], []>} : vector<64x32xf32>, vector<32x96xf32>, vector<64x96xf32> -> vector<64x96xf32>
    %11 = vector.extract_strided_slice %9 {offsets = [0, 0], sizes = [32, 32], strides = [1, 1]} : vector<32x96xf32> to vector<32x32xf32>
    %cst_8 = arith.constant dense<0.000000e+00> : vector<32x32xf32>
    %12 = tpu.matmul %8, %11, %cst_8 {dimension_numbers = #tpu.dot_dimension_numbers<[1], [0], [0], [1], [0, 0, 1, 1], [], []>} : vector<32x32xf32>, vector<32x32xf32>, vector<32x32xf32> -> vector<32x32xf32>
    %13 = vector.extract_strided_slice %10 {offsets = [0, 32], sizes = [64, 32], strides = [1, 1]} : vector<64x96xf32> to vector<64x32xf32>
    %14 = vector.extract_strided_slice %10 {offsets = [0, 64], sizes = [64, 32], strides = [1, 1]} : vector<64x96xf32> to vector<64x32xf32>
    %15 = vector.extract_strided_slice %2 {offsets = [0, 0], sizes = [32, 1], strides = [1, 1]} : vector<32x4xi32> to vector<32x1xi32>
    %16 = vector.broadcast %15 : vector<32x1xi32> to vector<32x64xi32>
    %17 = arith.cmpi eq, %16, %3 : vector<32x64xi32>
    %18 = vector.extract_strided_slice %2 {offsets = [0, 1], sizes = [32, 1], strides = [1, 1]} : vector<32x4xi32> to vector<32x1xi32>
    %19 = vector.broadcast %18 : vector<32x1xi32> to vector<32x64xi32>
    %20 = arith.cmpi eq, %19, %3 : vector<32x64xi32>
    %21 = arith.ori %17, %20 : vector<32x64xi1>
    %22 = vector.extract_strided_slice %2 {offsets = [0, 2], sizes = [32, 1], strides = [1, 1]} : vector<32x4xi32> to vector<32x1xi32>
    %23 = vector.broadcast %22 : vector<32x1xi32> to vector<32x64xi32>
    %24 = arith.cmpi eq, %23, %3 : vector<32x64xi32>
    %25 = arith.ori %21, %24 : vector<32x64xi1>
    %26 = vector.extract_strided_slice %2 {offsets = [0, 3], sizes = [32, 1], strides = [1, 1]} : vector<32x4xi32> to vector<32x1xi32>
    %27 = vector.broadcast %26 : vector<32x1xi32> to vector<32x64xi32>
    %28 = arith.cmpi eq, %27, %3 : vector<32x64xi32>
    %29 = arith.ori %25, %28 : vector<32x64xi1>
    %cst_9 = arith.constant dense<0.000000e+00> : vector<32x64xf32>
    %30 = tpu.matmul %12, %13, %cst_9 {dimension_numbers = #tpu.dot_dimension_numbers<[1], [1], [0], [0], [0, 0, 1, 0], [], []>} : vector<32x32xf32>, vector<64x32xf32>, vector<32x64xf32> -> vector<32x64xf32>
    %cst_10 = arith.constant -1.000000e+30 : f32
    %31 = vector.broadcast %cst_10 : f32 to vector<32x64xf32>
    %32 = arith.select %29, %30, %31 : vector<32x64xi1>, vector<32x64xf32>
    %cst_11 = arith.constant dense<0xFF800000> : vector<32xf32>
    %33 = vector.multi_reduction <maximumf>, %32, %cst_11 [1] : vector<32x64xf32> to vector<32xf32>
    %34 = vector.shape_cast %33 : vector<32xf32> to vector<32x1xf32>
    %35 = vector.broadcast %34 : vector<32x1xf32> to vector<32x64xf32>
    %36 = arith.subf %32, %35 : vector<32x64xf32>
    %37 = math.exp %36 : vector<32x64xf32>
    %cst_12 = arith.constant dense<0.000000e+00> : vector<32xf32>
    %38 = vector.multi_reduction <add>, %37, %cst_12 [1] : vector<32x64xf32> to vector<32xf32>
    %39 = vector.shape_cast %38 : vector<32xf32> to vector<32x1xf32>
    %40 = tpu.reciprocal %39 {approx = true} : vector<32x1xf32> -> vector<32x1xf32>
    %41 = vector.broadcast %40 : vector<32x1xf32> to vector<32x64xf32>
    %42 = arith.mulf %37, %41 : vector<32x64xf32>
    %cst_13 = arith.constant dense<0.000000e+00> : vector<32x32xf32>
    %43 = tpu.matmul %42, %14, %cst_13 {dimension_numbers = #tpu.dot_dimension_numbers<[1], [0], [0], [1], [0, 0, 1, 1], [], []>} : vector<32x64xf32>, vector<64x32xf32>, vector<32x32xf32> -> vector<32x32xf32>
    %44 = arith.addf %43, %8 : vector<32x32xf32>
    %cst_14 = arith.constant dense<0.000000e+00> : vector<32xf32>
    %45 = vector.multi_reduction <add>, %44, %cst_14 [0] : vector<32x32xf32> to vector<32xf32>
    %46 = vector.shape_cast %45 : vector<32xf32> to vector<1x32xf32>
    %cst_15 = arith.constant 3.200000e+01 : f32
    %47 = vector.broadcast %cst_15 : f32 to vector<1x32xf32>
    %48 = arith.divf %46, %47 : vector<1x32xf32>
    %49 = vector.broadcast %48 : vector<1x32xf32> to vector<32x32xf32>
    %50 = arith.subf %44, %49 : vector<32x32xf32>
    %51 = arith.mulf %50, %50 : vector<32x32xf32>
    %cst_16 = arith.constant dense<0.000000e+00> : vector<32xf32>
    %52 = vector.multi_reduction <add>, %51, %cst_16 [0] : vector<32x32xf32> to vector<32xf32>
    %53 = vector.shape_cast %52 : vector<32xf32> to vector<1x32xf32>
    %cst_17 = arith.constant 3.200000e+01 : f32
    %54 = vector.broadcast %cst_17 : f32 to vector<1x32xf32>
    %55 = arith.divf %53, %54 : vector<1x32xf32>
    %56 = vector.broadcast %48 : vector<1x32xf32> to vector<32x32xf32>
    %57 = arith.subf %44, %56 : vector<32x32xf32>
    %cst_18 = arith.constant 9.99999974E-6 : f32
    %58 = vector.broadcast %cst_18 : f32 to vector<1x32xf32>
    %59 = arith.addf %55, %58 : vector<1x32xf32>
    %60 = math.rsqrt %59 : vector<1x32xf32>
    %61 = vector.broadcast %60 : vector<1x32xf32> to vector<32x32xf32>
    %62 = arith.mulf %57, %61 : vector<32x32xf32>
    %c0_19 = arith.constant 0 : index
    %c0_20 = arith.constant 0 : index
    %63 = vector.load %arg4[%c0_19, %c0_20] : memref<32x64xf32, #tpu.memory_space<vmem>>, vector<32x64xf32>
    %cst_21 = arith.constant dense<0.000000e+00> : vector<32x64xf32>
    %64 = tpu.matmul %62, %63, %cst_21 {dimension_numbers = #tpu.dot_dimension_numbers<[1], [0], [0], [1], [0, 0, 1, 1], [], []>} : vector<32x32xf32>, vector<32x64xf32>, vector<32x64xf32> -> vector<32x64xf32>
    %c0_22 = arith.constant 0 : index
    %c0_23 = arith.constant 0 : index
    %65 = vector.load %arg5[%c0_22, %c0_23] : memref<1x64xf32, #tpu.memory_space<vmem>>, vector<1x64xf32>
    %66 = vector.broadcast %65 : vector<1x64xf32> to vector<32x64xf32>
    %67 = arith.addf %64, %66 : vector<32x64xf32>
    %cst_24 = arith.constant 0.000000e+00 : f32
    %68 = vector.broadcast %cst_24 : f32 to vector<32x64xf32>
    %69 = arith.maximumf %67, %68 : vector<32x64xf32>
    %c0_25 = arith.constant 0 : index
    %c0_26 = arith.constant 0 : index
    %70 = vector.load %arg6[%c0_25, %c0_26] : memref<64x32xf32, #tpu.memory_space<vmem>>, vector<64x32xf32>
    %cst_27 = arith.constant dense<0.000000e+00> : vector<32x32xf32>
    %71 = tpu.matmul %69, %70, %cst_27 {dimension_numbers = #tpu.dot_dimension_numbers<[1], [0], [0], [1], [0, 0, 1, 1], [], []>} : vector<32x64xf32>, vector<64x32xf32>, vector<32x32xf32> -> vector<32x32xf32>
    %c0_28 = arith.constant 0 : index
    %c0_29 = arith.constant 0 : index
    %72 = vector.load %arg7[%c0_28, %c0_29] : memref<1x32xf32, #tpu.memory_space<vmem>>, vector<1x32xf32>
    %73 = vector.broadcast %72 : vector<1x32xf32> to vector<32x32xf32>
    %74 = arith.addf %71, %73 : vector<32x32xf32>
    %75 = arith.addf %74, %44 : vector<32x32xf32>
    %c0_30 = arith.constant 0 : index
    %c0_31 = arith.constant 0 : index
    %76 = vector.load %arg8[%c0_30, %c0_31] : memref<32x32xf32, #tpu.memory_space<vmem>>, vector<32x32xf32>
    tpu.vector_store %arg8[%c0_30, %c0_31], %75 {strides = array<i32>} : memref<32x32xf32, #tpu.memory_space<vmem>>, vector<32x32xf32>,
    return
  }
}

module attributes {stable_mosaic.version = 11 : i64} {
  func.func @_fused_block_kernel(%arg0: memref<32x32xf32, #tpu.memory_space<vmem>>, %arg1: memref<16x1xi32, #tpu.memory_space<vmem>>, %arg2: memref<16x8xi32, #tpu.memory_space<vmem>>, %arg3: memref<32x96xf32, #tpu.memory_space<vmem>>, %arg4: memref<32x64xf32, #tpu.memory_space<vmem>>, %arg5: memref<1x64xf32, #tpu.memory_space<vmem>>, %arg6: memref<64x32xf32, #tpu.memory_space<vmem>>, %arg7: memref<1x32xf32, #tpu.memory_space<vmem>>, %arg8: memref<16x32xf32, #tpu.memory_space<vmem>>) attributes {dimension_semantics = [], scalar_prefetch = 0 : i64, scratch_operands = 0 : i64, tpu.core_type = #tpu.core_type<tc>} {
    %c0 = arith.constant 0 : index
    %c0_0 = arith.constant 0 : index
    %0 = vector.load %arg0[%c0, %c0_0] : memref<32x32xf32, #tpu.memory_space<vmem>>, vector<32x32xf32>
    %c0_1 = arith.constant 0 : index
    %c0_2 = arith.constant 0 : index
    %1 = vector.load %arg1[%c0_1, %c0_2] : memref<16x1xi32, #tpu.memory_space<vmem>>, vector<16x1xi32>
    %c0_3 = arith.constant 0 : index
    %c0_4 = arith.constant 0 : index
    %2 = vector.load %arg2[%c0_3, %c0_4] : memref<16x8xi32, #tpu.memory_space<vmem>>, vector<16x8xi32>
    %3 = tpu.iota {dimensions = array<i32: 1>} : vector<16x32xi32>
    %4 = vector.broadcast %1 : vector<16x1xi32> to vector<16x32xi32>
    %5 = arith.cmpi eq, %4, %3 : vector<16x32xi32>
    %6 = arith.extui %5 : vector<16x32xi1> to vector<16x32xi32>
    %7 = arith.sitofp %6 : vector<16x32xi32> to vector<16x32xf32>
    %cst = arith.constant dense<0.000000e+00> : vector<16x32xf32>
    %8 = tpu.matmul %7, %0, %cst {dimension_numbers = #tpu.dot_dimension_numbers<[1], [0], [0], [1], [0, 0, 1, 1], [], []>} : vector<16x32xf32>, vector<32x32xf32>, vector<16x32xf32> -> vector<16x32xf32>
    %cst_5 = arith.constant dense<0.000000e+00> : vector<32xf32>
    %9 = vector.multi_reduction <add>, %0, %cst_5 [0] : vector<32x32xf32> to vector<32xf32>
    %10 = vector.shape_cast %9 : vector<32xf32> to vector<1x32xf32>
    %cst_6 = arith.constant dense<0.000000e+00> : vector<32xf32>
    %11 = vector.multi_reduction <add>, %8, %cst_6 [0] : vector<16x32xf32> to vector<32xf32>
    %12 = vector.shape_cast %11 : vector<32xf32> to vector<1x32xf32>
    %13 = arith.addf %10, %12 : vector<1x32xf32>
    %cst_7 = arith.constant 0.020833334 : f32
    %14 = vector.broadcast %cst_7 : f32 to vector<1x32xf32>
    %15 = arith.mulf %13, %14 : vector<1x32xf32>
    %16 = vector.broadcast %15 : vector<1x32xf32> to vector<32x32xf32>
    %17 = arith.subf %0, %16 : vector<32x32xf32>
    %18 = arith.mulf %17, %17 : vector<32x32xf32>
    %cst_8 = arith.constant dense<0.000000e+00> : vector<32xf32>
    %19 = vector.multi_reduction <add>, %18, %cst_8 [0] : vector<32x32xf32> to vector<32xf32>
    %20 = vector.shape_cast %19 : vector<32xf32> to vector<1x32xf32>
    %21 = vector.broadcast %15 : vector<1x32xf32> to vector<16x32xf32>
    %22 = arith.subf %8, %21 : vector<16x32xf32>
    %23 = arith.mulf %22, %22 : vector<16x32xf32>
    %cst_9 = arith.constant dense<0.000000e+00> : vector<32xf32>
    %24 = vector.multi_reduction <add>, %23, %cst_9 [0] : vector<16x32xf32> to vector<32xf32>
    %25 = vector.shape_cast %24 : vector<32xf32> to vector<1x32xf32>
    %26 = arith.addf %20, %25 : vector<1x32xf32>
    %cst_10 = arith.constant 0.020833334 : f32
    %27 = vector.broadcast %cst_10 : f32 to vector<1x32xf32>
    %28 = arith.mulf %26, %27 : vector<1x32xf32>
    %cst_11 = arith.constant 9.99999974E-6 : f32
    %29 = vector.broadcast %cst_11 : f32 to vector<1x32xf32>
    %30 = arith.addf %28, %29 : vector<1x32xf32>
    %31 = math.rsqrt %30 : vector<1x32xf32>
    %32 = vector.broadcast %15 : vector<1x32xf32> to vector<32x32xf32>
    %33 = arith.subf %0, %32 : vector<32x32xf32>
    %34 = vector.broadcast %31 : vector<1x32xf32> to vector<32x32xf32>
    %35 = arith.mulf %33, %34 : vector<32x32xf32>
    %36 = vector.broadcast %15 : vector<1x32xf32> to vector<16x32xf32>
    %37 = arith.subf %8, %36 : vector<16x32xf32>
    %38 = vector.broadcast %31 : vector<1x32xf32> to vector<16x32xf32>
    %39 = arith.mulf %37, %38 : vector<16x32xf32>
    %c0_12 = arith.constant 0 : index
    %c0_13 = arith.constant 0 : index
    %40 = vector.load %arg3[%c0_12, %c0_13] : memref<32x96xf32, #tpu.memory_space<vmem>>, vector<32x96xf32>
    %cst_14 = arith.constant dense<0.000000e+00> : vector<32x96xf32>
    %41 = tpu.matmul %35, %40, %cst_14 {dimension_numbers = #tpu.dot_dimension_numbers<[1], [0], [0], [1], [0, 0, 1, 1], [], []>} : vector<32x32xf32>, vector<32x96xf32>, vector<32x96xf32> -> vector<32x96xf32>
    %42 = vector.extract_strided_slice %40 {offsets = [0, 0], sizes = [32, 32], strides = [1, 1]} : vector<32x96xf32> to vector<32x32xf32>
    %cst_15 = arith.constant dense<0.000000e+00> : vector<16x32xf32>
    %43 = tpu.matmul %39, %42, %cst_15 {dimension_numbers = #tpu.dot_dimension_numbers<[1], [0], [0], [1], [0, 0, 1, 1], [], []>} : vector<16x32xf32>, vector<32x32xf32>, vector<16x32xf32> -> vector<16x32xf32>
    %44 = vector.extract_strided_slice %41 {offsets = [0, 32], sizes = [32, 32], strides = [1, 1]} : vector<32x96xf32> to vector<32x32xf32>
    %45 = vector.extract_strided_slice %41 {offsets = [0, 64], sizes = [32, 32], strides = [1, 1]} : vector<32x96xf32> to vector<32x32xf32>
    %46 = vector.extract_strided_slice %2 {offsets = [0, 0], sizes = [16, 1], strides = [1, 1]} : vector<16x8xi32> to vector<16x1xi32>
    %47 = vector.broadcast %46 : vector<16x1xi32> to vector<16x32xi32>
    %48 = arith.cmpi eq, %47, %3 : vector<16x32xi32>
    %49 = vector.extract_strided_slice %2 {offsets = [0, 1], sizes = [16, 1], strides = [1, 1]} : vector<16x8xi32> to vector<16x1xi32>
    %50 = vector.broadcast %49 : vector<16x1xi32> to vector<16x32xi32>
    %51 = arith.cmpi eq, %50, %3 : vector<16x32xi32>
    %52 = arith.ori %48, %51 : vector<16x32xi1>
    %53 = vector.extract_strided_slice %2 {offsets = [0, 2], sizes = [16, 1], strides = [1, 1]} : vector<16x8xi32> to vector<16x1xi32>
    %54 = vector.broadcast %53 : vector<16x1xi32> to vector<16x32xi32>
    %55 = arith.cmpi eq, %54, %3 : vector<16x32xi32>
    %56 = arith.ori %52, %55 : vector<16x32xi1>
    %57 = vector.extract_strided_slice %2 {offsets = [0, 3], sizes = [16, 1], strides = [1, 1]} : vector<16x8xi32> to vector<16x1xi32>
    %58 = vector.broadcast %57 : vector<16x1xi32> to vector<16x32xi32>
    %59 = arith.cmpi eq, %58, %3 : vector<16x32xi32>
    %60 = arith.ori %56, %59 : vector<16x32xi1>
    %61 = vector.extract_strided_slice %2 {offsets = [0, 4], sizes = [16, 1], strides = [1, 1]} : vector<16x8xi32> to vector<16x1xi32>
    %62 = vector.broadcast %61 : vector<16x1xi32> to vector<16x32xi32>
    %63 = arith.cmpi eq, %62, %3 : vector<16x32xi32>
    %64 = arith.ori %60, %63 : vector<16x32xi1>
    %65 = vector.extract_strided_slice %2 {offsets = [0, 5], sizes = [16, 1], strides = [1, 1]} : vector<16x8xi32> to vector<16x1xi32>
    %66 = vector.broadcast %65 : vector<16x1xi32> to vector<16x32xi32>
    %67 = arith.cmpi eq, %66, %3 : vector<16x32xi32>
    %68 = arith.ori %64, %67 : vector<16x32xi1>
    %69 = vector.extract_strided_slice %2 {offsets = [0, 6], sizes = [16, 1], strides = [1, 1]} : vector<16x8xi32> to vector<16x1xi32>
    %70 = vector.broadcast %69 : vector<16x1xi32> to vector<16x32xi32>
    %71 = arith.cmpi eq, %70, %3 : vector<16x32xi32>
    %72 = arith.ori %68, %71 : vector<16x32xi1>
    %73 = vector.extract_strided_slice %2 {offsets = [0, 7], sizes = [16, 1], strides = [1, 1]} : vector<16x8xi32> to vector<16x1xi32>
    %74 = vector.broadcast %73 : vector<16x1xi32> to vector<16x32xi32>
    %75 = arith.cmpi eq, %74, %3 : vector<16x32xi32>
    %76 = arith.ori %72, %75 : vector<16x32xi1>
    %cst_16 = arith.constant dense<0.000000e+00> : vector<16x32xf32>
    %77 = tpu.matmul %43, %44, %cst_16 {dimension_numbers = #tpu.dot_dimension_numbers<[1], [1], [0], [0], [0, 0, 1, 0], [], []>} : vector<16x32xf32>, vector<32x32xf32>, vector<16x32xf32> -> vector<16x32xf32>
    %cst_17 = arith.constant -1.000000e+30 : f32
    %78 = vector.broadcast %cst_17 : f32 to vector<16x32xf32>
    %79 = arith.select %76, %77, %78 : vector<16x32xi1>, vector<16x32xf32>
    %cst_18 = arith.constant dense<0xFF800000> : vector<16xf32>
    %80 = vector.multi_reduction <maximumf>, %79, %cst_18 [1] : vector<16x32xf32> to vector<16xf32>
    %81 = vector.shape_cast %80 : vector<16xf32> to vector<16x1xf32>
    %82 = vector.broadcast %81 : vector<16x1xf32> to vector<16x32xf32>
    %83 = arith.subf %79, %82 : vector<16x32xf32>
    %84 = math.exp %83 : vector<16x32xf32>
    %cst_19 = arith.constant dense<0.000000e+00> : vector<16xf32>
    %85 = vector.multi_reduction <add>, %84, %cst_19 [1] : vector<16x32xf32> to vector<16xf32>
    %86 = vector.shape_cast %85 : vector<16xf32> to vector<16x1xf32>
    %87 = tpu.reciprocal %86 {approx = true} : vector<16x1xf32> -> vector<16x1xf32>
    %88 = vector.broadcast %87 : vector<16x1xf32> to vector<16x32xf32>
    %89 = arith.mulf %84, %88 : vector<16x32xf32>
    %cst_20 = arith.constant dense<0.000000e+00> : vector<16x32xf32>
    %90 = tpu.matmul %89, %45, %cst_20 {dimension_numbers = #tpu.dot_dimension_numbers<[1], [0], [0], [1], [0, 0, 1, 1], [], []>} : vector<16x32xf32>, vector<32x32xf32>, vector<16x32xf32> -> vector<16x32xf32>
    %91 = arith.addf %90, %8 : vector<16x32xf32>
    %cst_21 = arith.constant dense<0.000000e+00> : vector<32xf32>
    %92 = vector.multi_reduction <add>, %91, %cst_21 [0] : vector<16x32xf32> to vector<32xf32>
    %93 = vector.shape_cast %92 : vector<32xf32> to vector<1x32xf32>
    %cst_22 = arith.constant 1.600000e+01 : f32
    %94 = vector.broadcast %cst_22 : f32 to vector<1x32xf32>
    %95 = arith.divf %93, %94 : vector<1x32xf32>
    %96 = vector.broadcast %95 : vector<1x32xf32> to vector<16x32xf32>
    %97 = arith.subf %91, %96 : vector<16x32xf32>
    %98 = arith.mulf %97, %97 : vector<16x32xf32>
    %cst_23 = arith.constant dense<0.000000e+00> : vector<32xf32>
    %99 = vector.multi_reduction <add>, %98, %cst_23 [0] : vector<16x32xf32> to vector<32xf32>
    %100 = vector.shape_cast %99 : vector<32xf32> to vector<1x32xf32>
    %cst_24 = arith.constant 1.600000e+01 : f32
    %101 = vector.broadcast %cst_24 : f32 to vector<1x32xf32>
    %102 = arith.divf %100, %101 : vector<1x32xf32>
    %103 = vector.broadcast %95 : vector<1x32xf32> to vector<16x32xf32>
    %104 = arith.subf %91, %103 : vector<16x32xf32>
    %cst_25 = arith.constant 9.99999974E-6 : f32
    %105 = vector.broadcast %cst_25 : f32 to vector<1x32xf32>
    %106 = arith.addf %102, %105 : vector<1x32xf32>
    %107 = math.rsqrt %106 : vector<1x32xf32>
    %108 = vector.broadcast %107 : vector<1x32xf32> to vector<16x32xf32>
    %109 = arith.mulf %104, %108 : vector<16x32xf32>
    %c0_26 = arith.constant 0 : index
    %c0_27 = arith.constant 0 : index
    %110 = vector.load %arg4[%c0_26, %c0_27] : memref<32x64xf32, #tpu.memory_space<vmem>>, vector<32x64xf32>
    %cst_28 = arith.constant dense<0.000000e+00> : vector<16x64xf32>
    %111 = tpu.matmul %109, %110, %cst_28 {dimension_numbers = #tpu.dot_dimension_numbers<[1], [0], [0], [1], [0, 0, 1, 1], [], []>} : vector<16x32xf32>, vector<32x64xf32>, vector<16x64xf32> -> vector<16x64xf32>
    %c0_29 = arith.constant 0 : index
    %c0_30 = arith.constant 0 : index
    %112 = vector.load %arg5[%c0_29, %c0_30] : memref<1x64xf32, #tpu.memory_space<vmem>>, vector<1x64xf32>
    %113 = vector.broadcast %112 : vector<1x64xf32> to vector<16x64xf32>
    %114 = arith.addf %111, %113 : vector<16x64xf32>
    %cst_31 = arith.constant 0.000000e+00 : f32
    %115 = vector.broadcast %cst_31 : f32 to vector<16x64xf32>
    %116 = arith.maximumf %114, %115 : vector<16x64xf32>
    %c0_32 = arith.constant 0 : index
    %c0_33 = arith.constant 0 : index
    %117 = vector.load %arg6[%c0_32, %c0_33] : memref<64x32xf32, #tpu.memory_space<vmem>>, vector<64x32xf32>
    %cst_34 = arith.constant dense<0.000000e+00> : vector<16x32xf32>
    %118 = tpu.matmul %116, %117, %cst_34 {dimension_numbers = #tpu.dot_dimension_numbers<[1], [0], [0], [1], [0, 0, 1, 1], [], []>} : vector<16x64xf32>, vector<64x32xf32>, vector<16x32xf32> -> vector<16x32xf32>
    %c0_35 = arith.constant 0 : index
    %c0_36 = arith.constant 0 : index
    %119 = vector.load %arg7[%c0_35, %c0_36] : memref<1x32xf32, #tpu.memory_space<vmem>>, vector<1x32xf32>
    %120 = vector.broadcast %119 : vector<1x32xf32> to vector<16x32xf32>
    %121 = arith.addf %118, %120 : vector<16x32xf32>
    %122 = arith.addf %121, %91 : vector<16x32xf32>
    %c0_37 = arith.constant 0 : index
    %c0_38 = arith.constant 0 : index
    %123 = vector.load %arg8[%c0_37, %c0_38] : memref<16x32xf32, #tpu.memory_space<vmem>>, vector<16x32xf32>
    tpu.vector_store %arg8[%c0_37, %c0_38], %122 {strides = array<i32>} : memref<16x32xf32, #tpu.memory_space<vmem>>, vector<16x32xf32>,
    return
  }
}

</mosaic_0001>

<llo_original>
// kernel: neg.3
$region0: #{neg.3}
  #allocation0 [shape = 's32[1]{0}', space=sflag, size = 0x4, scoped, tag = 'scoped memory for neg.3']
  %s0 = inlined_call_operand.vmem [shape: f32[2,8,16], index: 0, kind: input, shape index: {}]
  %s1 = inlined_call_operand.vmem [shape: f32[2,8,16], index: 1, kind: output, shape index: {}]
  %v2 = vld [vmem:[%s0] sm:$0xff]
  %3 = xla_tuple %v2
  %4 = xla_tuple %3
  %v5 = vxor.u32 %v2, 2147483648
  %6 = xla_tuple %v5
  %7 = vst [vmem:[%s1] sm:$0xff] %v5
  %s8 = scalar_lea.vmem %s0, 8
  %v9 = vld [vmem:[%s8] sm:$0xff]
  %10 = xla_tuple %v9
  %11 = xla_tuple %10
  %v12 = vxor.u32 %v9, 2147483648
  %13 = xla_tuple %v12
  %s14 = scalar_lea.vmem %s1, 8
  %15 = vst [vmem:[%s14] sm:$0xff] %v12

// kernel: neg.2
$region0: #{neg.2}
  #allocation0 [shape = 's32[1]{0}', space=sflag, size = 0x4, scoped, tag = 'scoped memory for neg.2']
  %s0 = inlined_call_operand.vmem [shape: f32[2,16,32], index: 0, kind: input, shape index: {}]
  %s1 = inlined_call_operand.vmem [shape: f32[2,16,32], index: 1, kind: output, shape index: {}]
  %v2 = vld [vmem:[%s0] sm:$0xff]
  %3 = xla_tuple %v2
  %4 = xla_tuple %3
  %v5 = vxor.u32 %v2, 2147483648
  %6 = xla_tuple %v5
  %7 = vst [vmem:[%s1] sm:$0xff] %v5
  %s8 = scalar_lea.vmem %s0, 16
  %v9 = vld [vmem:[%s8] sm:$0xff]
  %10 = xla_tuple %v9
  %11 = xla_tuple %10
  %v12 = vxor.u32 %v9, 2147483648
  %13 = xla_tuple %v12
  %s14 = scalar_lea.vmem %s1, 16
  %15 = vst [vmem:[%s14] sm:$0xff] %v12
  %s16 = scalar_lea.vmem %s0, 8
  %v17 = vld [vmem:[%s16] sm:$0xff]
  %18 = xla_tuple %v17
  %19 = xla_tuple %18
  %v20 = vxor.u32 %v17, 2147483648
  %21 = xla_tuple %v20
  %s22 = scalar_lea.vmem %s1, 8
  %23 = vst [vmem:[%s22] sm:$0xff] %v20
  %s24 = scalar_lea.vmem %s0, 24
  %v25 = vld [vmem:[%s24] sm:$0xff]
  %26 = xla_tuple %v25
  %27 = xla_tuple %26
  %v28 = vxor.u32 %v25, 2147483648
  %29 = xla_tuple %v28
  %s30 = scalar_lea.vmem %s1, 24
  %31 = vst [vmem:[%s30] sm:$0xff] %v28

// kernel: token_set_transformer_forward.5
$region0: #{token_set_transformer_forward.5}
  #allocation0 [shape = 'u32[]', space=smem, size = 0x4, offset = 0x4, fixed_abs, tag = 'smem constant byte address 0x4 - core index']
  #allocation1 [shape = 'u32[144,128]{1,0:T(1,128)}', space=vmem, size = 0x12000, scoped, tag = 'internal scratch']
  %s0 = inlined_call_operand.vmem [shape: f32[16,32], index: 0, kind: input, shape index: {}]
  %s1 = inlined_call_operand.vmem [shape: f32[32,128], index: 1, kind: input, shape index: {}]
  %s2 = inlined_call_operand.vmem [shape: f32[1,128], index: 2, kind: input, shape index: {}]
  %s3 = inlined_call_operand.vmem [shape: f32[2,128], index: 3, kind: output, shape index: {}]
  %s4 = sld [smem:[#allocation0]]
  $region22: #{token_set_transformer_forward.5} parent=0
    _
  %s6 = ssub.s32 1, %s4
  %s7 = scalar_select 0, %s6, %s4
  // Predicated region
  $region2: #{token_set_transformer_forward.5} parent=0 // pred_check
    _
  $region3: #{token_set_transformer_forward.5} parent=0 // pred_check_branch
    %9 = sbr.rel (0) target = $region5
  $region4: #{token_set_transformer_forward.5} parent=0 // pred_region
    _
  $region5: #{token_set_transformer_forward.5} parent=0 // pred_fallthru
    _
  // Predicated region
  $region6: #{token_set_transformer_forward.5} parent=0 // pred_check
    _
  $region7: #{token_set_transformer_forward.5} parent=0 // pred_check_branch
    %11 = sbr.rel (0) target = $region9
  $region8: #{token_set_transformer_forward.5} parent=0 // pred_region
    _
  $region9: #{token_set_transformer_forward.5} parent=0 // pred_fallthru
    _
  // Predicated region
  $region10: #{token_set_transformer_forward.5} parent=0 // pred_check
    _
  $region11: #{token_set_transformer_forward.5} parent=0 // pred_check_branch
    %13 = sbr.rel (0) target = $region13
  $region12: #{token_set_transformer_forward.5} parent=0 // pred_region
    _
  $region13: #{token_set_transformer_forward.5} parent=0 // pred_fallthru
    _
  %v14 = vld [vmem:[%s0] sm:$0xff]
  %v15 = vld [vmem:[%s0 + $0x8] sm:$0xff]
  %v16 = vlaneseq
  %v17 = vshrl.u32 %v16, 7
  %v18 = vlaneseq
  %v19 = vand.u32 %v18, 127
  %v20 = vmul.u32 %v17, 8
  %vm21 = vcmp.ge.s32.totalorder %v19, %v20
  %v22 = vadd.s32 %v20, 8
  %vm23 = vcmp.lt.s32.totalorder %v19, %v22
  %vm24 = vmand %vm21, %vm23
  %v25 = vsel %vm24, 0.125, 0.0
  %vm26 = vcmask 130048
  %v28 = vsel %vm26, %v25, 0
  %30 = vmatprep.subr.mxu0 0.0
  %31 = vmatpush1.msra.mxu0 %v14
  %32 = vmatprep.subr.mxu0 0.0
  %33 = vmatpush1.msra.mxu0 %v15
  %34 = vmatprep.subr.mxu0 0.0
  %35 = vmatpush1.msra.mxu0 0.0
  %36 = vmatprep.subr.mxu0 0.0
  %37 = vmatpush1.msra.mxu0 0.0
  %38 = vmatprep.subr.mxu0 0.0
  %39 = vmatpush1.msra.mxu0 0.0
  %40 = vmatprep.subr.mxu0 0.0
  %41 = vmatpush1.msra.mxu0 0.0
  %42 = vmatprep.subr.mxu0 0.0
  %43 = vmatpush1.msra.mxu0 0.0
  %44 = vmatprep.subr.mxu0 0.0
  %45 = vmatpush1.msra.mxu0 0.0
  %46 = vmatprep.subr.mxu0 0.0
  %47 = vmatpush1.msra.mxu0 0.0
  %48 = vmatprep.subr.mxu0 0.0
  %49 = vmatpush1.msra.mxu0 0.0
  %50 = vmatprep.subr.mxu0 0.0
  %51 = vmatpush1.msra.mxu0 0.0
  %52 = vmatprep.subr.mxu0 0.0
  %53 = vmatpush1.msra.mxu0 0.0
  %54 = vmatprep.subr.mxu0 0.0
  %55 = vmatpush1.msra.mxu0 0.0
  %56 = vmatprep.subr.mxu0 0.0
  %57 = vmatpush1.msra.mxu0 0.0
  %58 = vmatprep.subr.mxu0 0.0
  %59 = vmatpush1.msra.mxu0 0.0
  %60 = vmatprep.subr.mxu0 0.0
  %61 = vmatpush1.msra.mxu0 0.0
  %62 = vmatprep.subr.mxu0 0.0
  %63 = vmatpush1.msra.mxu0 0.0
  %64 = vmatprep.subr.mxu0 0.0
  %65 = vmatpush1.msra.mxu0 0.0
  %66 = vmatprep.subr.mxu0 0.0
  %67 = vmatpush1.msra.mxu0 0.0
  %68 = vmatprep.subr.mxu0 0.0
  %69 = vmatpush1.msra.mxu0 0.0
  %70 = vmatprep.subr.mxu0 0.0
  %71 = vmatpush1.msra.mxu0 0.0
  %72 = vmatprep.subr.mxu0 0.0
  %73 = vmatpush1.msra.mxu0 0.0
  %74 = vmatprep.subr.mxu0 0.0
  %75 = vmatpush1.msra.mxu0 0.0
  %76 = vmatprep.subr.mxu0 0.0
  %77 = vmatpush1.msra.mxu0 0.0
  %78 = vmatprep.subr.mxu0 0.0
  %79 = vmatpush1.msra.mxu0 0.0
  %80 = vmatprep.subr.mxu0 0.0
  %81 = vmatpush1.msra.mxu0 0.0
  %82 = vmatprep.subr.mxu0 0.0
  %83 = vmatpush1.msra.mxu0 0.0
  %84 = vmatprep.subr.mxu0 0.0
  %85 = vmatpush1.msra.mxu0 0.0
  %86 = vmatprep.subr.mxu0 0.0
  %87 = vmatpush1.msra.mxu0 0.0
  %88 = vmatprep.subr.mxu0 0.0
  %89 = vmatpush1.msra.mxu0 0.0
  %90 = vmatprep.subr.mxu0 0.0
  %91 = vmatpush1.msra.mxu0 0.0
  %92 = vmatprep.subr.mxu0 0.0
  %93 = vmatpush1.msra.mxu0 0.0
  %94 = vmatprep.mubr.f32.mxu0 0.0
  %95 = vmatmul.mubr.f32.gmra.mrb[0].mxu0 %v28
  %v96 = vpop.f32.mrb[0].mxu0
  %v97 = vadd.f32 0.0, %v96
  %v98 = vpop.f32.mrb[0].mxu0
  %99 = vdwg.mxu0
  %v100 = vld [vmem:[%s1] sm:$0xff]
  %v101 = vld [vmem:[%s1 + $0x8] sm:$0xff]
  %v102 = vld [vmem:[%s1 + $0x10] sm:$0xff]
  %v103 = vld [vmem:[%s1 + $0x18] sm:$0xff]
  %v104 = vld [vmem:[%s2] sm:$0x1]
  %v106 = vlaneseq
  %v107 = vshrl.u32 %v106, 7
  %v108 = vsub.s32 0, %v107
  %v109 = vrot.slane %v104, %v108
  %vm111 = vcmask 261120
  %v113 = vsel %vm111, %v97, 0
  %115 = vmatprep.subr.mxu0 0.0
  %116 = vmatpush1.msra.mxu0 %v100
  %117 = vmatprep.subr.mxu0 0.0
  %118 = vmatpush1.msra.mxu0 %v101
  %119 = vmatprep.subr.mxu0 0.0
  %120 = vmatpush1.msra.mxu0 %v102
  %121 = vmatprep.subr.mxu0 0.0
  %122 = vmatpush1.msra.mxu0 %v103
  %123 = vmatprep.subr.mxu0 0.0
  %124 = vmatpush1.msra.mxu0 0.0
  %125 = vmatprep.subr.mxu0 0.0
  %126 = vmatpush1.msra.mxu0 0.0
  %127 = vmatprep.subr.mxu0 0.0
  %128 = vmatpush1.msra.mxu0 0.0
  %129 = vmatprep.subr.mxu0 0.0
  %130 = vmatpush1.msra.mxu0 0.0
  %131 = vmatprep.subr.mxu0 0.0
  %132 = vmatpush1.msra.mxu0 0.0
  %133 = vmatprep.subr.mxu0 0.0
  %134 = vmatpush1.msra.mxu0 0.0
  %135 = vmatprep.subr.mxu0 0.0
  %136 = vmatpush1.msra.mxu0 0.0
  %137 = vmatprep.subr.mxu0 0.0
  %138 = vmatpush1.msra.mxu0 0.0
  %139 = vmatprep.subr.mxu0 0.0
  %140 = vmatpush1.msra.mxu0 0.0
  %141 = vmatprep.subr.mxu0 0.0
  %142 = vmatpush1.msra.mxu0 0.0
  %143 = vmatprep.subr.mxu0 0.0
  %144 = vmatpush1.msra.mxu0 0.0
  %145 = vmatprep.subr.mxu0 0.0
  %146 = vmatpush1.msra.mxu0 0.0
  %147 = vmatprep.subr.mxu0 0.0
  %148 = vmatpush1.msra.mxu0 0.0
  %149 = vmatprep.subr.mxu0 0.0
  %150 = vmatpush1.msra.mxu0 0.0
  %151 = vmatprep.subr.mxu0 0.0
  %152 = vmatpush1.msra.mxu0 0.0
  %153 = vmatprep.subr.mxu0 0.0
  %154 = vmatpush1.msra.mxu0 0.0
  %155 = vmatprep.subr.mxu0 0.0
  %156 = vmatpush1.msra.mxu0 0.0
  %157 = vmatprep.subr.mxu0 0.0
  %158 = vmatpush1.msra.mxu0 0.0
  %159 = vmatprep.subr.mxu0 0.0
  %160 = vmatpush1.msra.mxu0 0.0
  %161 = vmatprep.subr.mxu0 0.0
  %162 = vmatpush1.msra.mxu0 0.0
  %163 = vmatprep.subr.mxu0 0.0
  %164 = vmatpush1.msra.mxu0 0.0
  %165 = vmatprep.subr.mxu0 0.0
  %166 = vmatpush1.msra.mxu0 0.0
  %167 = vmatprep.subr.mxu0 0.0
  %168 = vmatpush1.msra.mxu0 0.0
  %169 = vmatprep.subr.mxu0 0.0
  %170 = vmatpush1.msra.mxu0 0.0
  %171 = vmatprep.subr.mxu0 0.0
  %172 = vmatpush1.msra.mxu0 0.0
  %173 = vmatprep.subr.mxu0 0.0
  %174 = vmatpush1.msra.mxu0 0.0
  %175 = vmatprep.subr.mxu0 0.0
  %176 = vmatpush1.msra.mxu0 0.0
  %177 = vmatprep.subr.mxu0 0.0
  %178 = vmatpush1.msra.mxu0 0.0
  %179 = vmatprep.mubr.f32.mxu0 0.0
  %180 = vmatmul.mubr.f32.gmra.mrb[0].mxu0 %v113
  %v181 = vpop.f32.mrb[0].mxu0
  %v182 = vadd.f32 %v109, %v181
  %v183 = vpop.f32.mrb[0].mxu0
  %184 = vdwg.mxu0
  %vm185 = vcmask 1041408
  %v186 = vsel %vm185, %v182, 0.0
  %v187 = vrot.slane %v186, 4
  %v188 = vadd.f32 %v186, %v187
  %v189 = vrot.slane %v188, 2
  %v190 = vadd.f32 %v188, %v189
  %v191 = vrot.slane %v190, 1
  %v192 = vadd.f32 %v190, %v191
  %v193 = vrcp.pop 2.0
  %v194 = vmul.f32 %v192, %v193
  %v195 = vsub.f32 %v182, %v194
  %v196 = vmul.f32 %v195, %v195
  %v197 = vsel %vm185, %v196, 0.0
  %v198 = vrot.slane %v197, 4
  %v199 = vadd.f32 %v197, %v198
  %v200 = vrot.slane %v199, 2
  %v201 = vadd.f32 %v199, %v200
  %v202 = vrot.slane %v201, 1
  %v203 = vadd.f32 %v201, %v202
  %v204 = vmul.f32 %v203, %v193
  %v205 = vadd.f32 %v204, 1e-05
  %v206 = vrsqrt.pop %v205
  %v207 = vmul.f32 %v195, %v206
  %v208 = vmax.f32 %v207, 0.0
  %209 = vst [vmem:[%s3] sm:$0x3] %v208
  // Predicated region
  $region14: #{token_set_transformer_forward.5} parent=0 // pred_check
    _
  $region15: #{token_set_transformer_forward.5} parent=0 // pred_check_branch
    %211 = sbr.rel (0) target = $region17
  $region16: #{token_set_transformer_forward.5} parent=0 // pred_region
    _
  $region17: #{token_set_transformer_forward.5} parent=0 // pred_fallthru
    _
  // Predicated region
  $region18: #{token_set_transformer_forward.5} parent=0 // pred_check
    _
  $region19: #{token_set_transformer_forward.5} parent=0 // pred_check_branch
    %213 = sbr.rel (0) target = $region21
  $region20: #{token_set_transformer_forward.5} parent=0 // pred_region
    _
  $region21: #{token_set_transformer_forward.5} parent=0 // pred_fallthru
    _

// kernel: token_set_transformer_forward.3
$region0: #{token_set_transformer_forward.3}
  #allocation0 [shape = 'u32[]', space=smem, size = 0x4, offset = 0x4, fixed_abs, tag = 'smem constant byte address 0x4 - core index']
  #allocation1 [shape = 'u32[144,128]{1,0:T(1,128)}', space=vmem, size = 0x12000, scoped, tag = 'internal scratch']
  %s0 = inlined_call_operand.vmem [shape: f32[64,32], index: 0, kind: input, shape index: {}]
  %s1 = inlined_call_operand.vmem [shape: s32[32,1], index: 1, kind: input, shape index: {}]
  %s2 = inlined_call_operand.vmem [shape: s32[32,4], index: 2, kind: input, shape index: {}]
  %s3 = inlined_call_operand.vmem [shape: f32[32,96], index: 3, kind: input, shape index: {}]
  %s4 = inlined_call_operand.vmem [shape: f32[32,64], index: 4, kind: input, shape index: {}]
  %s5 = inlined_call_operand.vmem [shape: f32[1,64], index: 5, kind: input, shape index: {}]
  %s6 = inlined_call_operand.vmem [shape: f32[64,32], index: 6, kind: input, shape index: {}]
  %s7 = inlined_call_operand.vmem [shape: f32[1,32], index: 7, kind: input, shape index: {}]
  %s8 = inlined_call_operand.vmem [shape: f32[32,32], index: 8, kind: output, shape index: {}]
  %s9 = sld [smem:[#allocation0]]
  $region42: #{token_set_transformer_forward.3} parent=0
    _
  %s11 = ssub.s32 1, %s9
  %s12 = scalar_select 0, %s11, %s9
  // Predicated region
  $region2: #{token_set_transformer_forward.3} parent=0 // pred_check
    _
  $region3: #{token_set_transformer_forward.3} parent=0 // pred_check_branch
    %14 = sbr.rel (0) target = $region5
  $region4: #{token_set_transformer_forward.3} parent=0 // pred_region
    _
  $region5: #{token_set_transformer_forward.3} parent=0 // pred_fallthru
    _
  // Predicated region
  $region6: #{token_set_transformer_forward.3} parent=0 // pred_check
    _
  $region7: #{token_set_transformer_forward.3} parent=0 // pred_check_branch
    %16 = sbr.rel (0) target = $region9
  $region8: #{token_set_transformer_forward.3} parent=0 // pred_region
    _
  $region9: #{token_set_transformer_forward.3} parent=0 // pred_fallthru
    _
  // Predicated region
  $region10: #{token_set_transformer_forward.3} parent=0 // pred_check
    _
  $region11: #{token_set_transformer_forward.3} parent=0 // pred_check_branch
    %18 = sbr.rel (0) target = $region13
  $region12: #{token_set_transformer_forward.3} parent=0 // pred_region
    _
  $region13: #{token_set_transformer_forward.3} parent=0 // pred_fallthru
    _
  // Predicated region
  $region14: #{token_set_transformer_forward.3} parent=0 // pred_check
    _
  $region15: #{token_set_transformer_forward.3} parent=0 // pred_check_branch
    %20 = sbr.rel (0) target = $region17
  $region16: #{token_set_transformer_forward.3} parent=0 // pred_region
    _
  $region17: #{token_set_transformer_forward.3} parent=0 // pred_fallthru
    _
  // Predicated region
  $region18: #{token_set_transformer_forward.3} parent=0 // pred_check
    _
  $region19: #{token_set_transformer_forward.3} parent=0 // pred_check_branch
    %22 = sbr.rel (0) target = $region21
  $region20: #{token_set_transformer_forward.3} parent=0 // pred_region
    _
  $region21: #{token_set_transformer_forward.3} parent=0 // pred_fallthru
    _
  // Predicated region
  $region22: #{token_set_transformer_forward.3} parent=0 // pred_check
    _
  $region23: #{token_set_transformer_forward.3} parent=0 // pred_check_branch
    %24 = sbr.rel (0) target = $region25
  $region24: #{token_set_transformer_forward.3} parent=0 // pred_region
    _
  $region25: #{token_set_transformer_forward.3} parent=0 // pred_fallthru
    _
  // Predicated region
  $region26: #{token_set_transformer_forward.3} parent=0 // pred_check
    _
  $region27: #{token_set_transformer_forward.3} parent=0 // pred_check_branch
    %26 = sbr.rel (0) target = $region29
  $region28: #{token_set_transformer_forward.3} parent=0 // pred_region
    _
  $region29: #{token_set_transformer_forward.3} parent=0 // pred_fallthru
    _
  // Predicated region
  $region30: #{token_set_transformer_forward.3} parent=0 // pred_check
    _
  $region31: #{token_set_transformer_forward.3} parent=0 // pred_check_branch
    %28 = sbr.rel (0) target = $region33
  $region32: #{token_set_transformer_forward.3} parent=0 // pred_region
    _
  $region33: #{token_set_transformer_forward.3} parent=0 // pred_fallthru
    _
  %v29 = vld [vmem:[%s0] sm:$0xff]
  %v30 = vld [vmem:[%s0 + $0x8] sm:$0xff]
  %v31 = vld [vmem:[%s0 + $0x10] sm:$0xff]
  %v32 = vld [vmem:[%s0 + $0x18] sm:$0xff]
  %v33 = vld [vmem:[%s0 + $0x20] sm:$0xff]
  %v34 = vld [vmem:[%s0 + $0x28] sm:$0xff]
  %v35 = vld [vmem:[%s0 + $0x30] sm:$0xff]
  %v36 = vld [vmem:[%s0 + $0x38] sm:$0xff]
  %v37 = vld [vmem:[%s1] sm:$0xff]
  %v38 = vld [vmem:[%s1 + $0x8] sm:$0xff]
  %v39 = vld [vmem:[%s1 + $0x10] sm:$0xff]
  %v40 = vld [vmem:[%s1 + $0x18] sm:$0xff]
  %v41 = vld [vmem:[%s2] sm:$0xff]
  %v42 = vld [vmem:[%s2 + $0x8] sm:$0xff]
  %v43 = vld [vmem:[%s2 + $0x10] sm:$0xff]
  %v44 = vld [vmem:[%s2 + $0x18] sm:$0xff]
  %v45 = vlaneseq
  %v46 = vand.u32 %v45, 127
  %47 = vset.pattern.permute.xlu0 0
  %48 = vperm.xlu0 %47, %v37
  %v49 = vpop.permute.xlu0 %48
  %50 = vset.pattern.permute.xlu0 0
  %51 = vperm.xlu0 %50, %v38
  %v52 = vpop.permute.xlu0 %51
  %53 = vset.pattern.permute.xlu0 0
  %54 = vperm.xlu0 %53, %v39
  %v55 = vpop.permute.xlu0 %54
  %56 = vset.pattern.permute.xlu0 0
  %57 = vperm.xlu0 %56, %v40
  %v58 = vpop.permute.xlu0 %57
  %vm59 = vcmp.eq.s32.totalorder %v49, %v46
  %vm60 = vcmp.eq.s32.totalorder %v52, %v46
  %vm61 = vcmp.eq.s32.totalorder %v55, %v46
  %vm62 = vcmp.eq.s32.totalorder %v58, %v46
  %v63 = vsel %vm59, 1, 0
  %v64 = vsel %vm60, 1, 0
  %v65 = vsel %vm61, 1, 0
  %v66 = vsel %vm62, 1, 0
  %v67 = vcvt.s32.f32 %v63
  %v68 = vcvt.s32.f32 %v64
  %v69 = vcvt.s32.f32 %v65
  %v70 = vcvt.s32.f32 %v66
  %vm71 = vcmask 523264
  %v73 = vsel %vm71, %v67, 0
  %v76 = vsel %vm71, %v68, 0
  %v79 = vsel %vm71, %v69, 0
  %v82 = vsel %vm71, %v70, 0
  %84 = vmatprep.subr.mxu0 0.0
  %85 = vmatpush1.msra.mxu0 %v29
  %86 = vmatprep.subr.mxu0 0.0
  %87 = vmatpush1.msra.mxu0 %v30
  %88 = vmatprep.subr.mxu0 0.0
  %89 = vmatpush1.msra.mxu0 %v31
  %90 = vmatprep.subr.mxu0 0.0
  %91 = vmatpush1.msra.mxu0 %v32
  %92 = vmatprep.subr.mxu0 0.0
  %93 = vmatpush1.msra.mxu0 %v33
  %94 = vmatprep.subr.mxu0 0.0
  %95 = vmatpush1.msra.mxu0 %v34
  %96 = vmatprep.subr.mxu0 0.0
  %97 = vmatpush1.msra.mxu0 %v35
  %98 = vmatprep.subr.mxu0 0.0
  %99 = vmatpush1.msra.mxu0 %v36
  %100 = vmatprep.subr.mxu0 0.0
  %101 = vmatpush1.msra.mxu0 0.0
  %102 = vmatprep.subr.mxu0 0.0
  %103 = vmatpush1.msra.mxu0 0.0
  %104 = vmatprep.subr.mxu0 0.0
  %105 = vmatpush1.msra.mxu0 0.0
  %106 = vmatprep.subr.mxu0 0.0
  %107 = vmatpush1.msra.mxu0 0.0
  %108 = vmatprep.subr.mxu0 0.0
  %109 = vmatpush1.msra.mxu0 0.0
  %110 = vmatprep.subr.mxu0 0.0
  %111 = vmatpush1.msra.mxu0 0.0
  %112 = vmatprep.subr.mxu0 0.0
  %113 = vmatpush1.msra.mxu0 0.0
  %114 = vmatprep.subr.mxu0 0.0
  %115 = vmatpush1.msra.mxu0 0.0
  %116 = vmatprep.subr.mxu0 0.0
  %117 = vmatpush1.msra.mxu0 0.0
  %118 = vmatprep.subr.mxu0 0.0
  %119 = vmatpush1.msra.mxu0 0.0
  %120 = vmatprep.subr.mxu0 0.0
  %121 = vmatpush1.msra.mxu0 0.0
  %122 = vmatprep.subr.mxu0 0.0
  %123 = vmatpush1.msra.mxu0 0.0
  %124 = vmatprep.subr.mxu0 0.0
  %125 = vmatpush1.msra.mxu0 0.0
  %126 = vmatprep.subr.mxu0 0.0
  %127 = vmatpush1.msra.mxu0 0.0
  %128 = vmatprep.subr.mxu0 0.0
  %129 = vmatpush1.msra.mxu0 0.0
  %130 = vmatprep.subr.mxu0 0.0
  %131 = vmatpush1.msra.mxu0 0.0
  %132 = vmatprep.subr.mxu0 0.0
  %133 = vmatpush1.msra.mxu0 0.0
  %134 = vmatprep.subr.mxu0 0.0
  %135 = vmatpush1.msra.mxu0 0.0
  %136 = vmatprep.subr.mxu0 0.0
  %137 = vmatpush1.msra.mxu0 0.0
  %138 = vmatprep.subr.mxu0 0.0
  %139 = vmatpush1.msra.mxu0 0.0
  %140 = vmatprep.subr.mxu0 0.0
  %141 = vmatpush1.msra.mxu0 0.0
  %142 = vmatprep.subr.mxu0 0.0
  %143 = vmatpush1.msra.mxu0 0.0
  %144 = vmatprep.subr.mxu0 0.0
  %145 = vmatpush1.msra.mxu0 0.0
  %146 = vmatprep.subr.mxu0 0.0
  %147 = vmatpush1.msra.mxu0 0.0
  %148 = vmatprep.mubr.f32.mxu0 0.0
  %149 = vmatmul.mubr.f32.gmra.mrb[0].mxu0 %v73
  %v150 = vpop.f32.mrb[0].mxu0
  %v151 = vadd.f32 0.0, %v150
  %v152 = vpop.f32.mrb[0].mxu0
  %153 = vmatprep.mubr.f32.mxu0 0.0
  %154 = vmatmul.mubr.f32.gmra.mrb[0].mxu0 %v76
  %v155 = vpop.f32.mrb[0].mxu0
  %v156 = vadd.f32 0.0, %v155
  %v157 = vpop.f32.mrb[0].mxu0
  %158 = vmatprep.mubr.f32.mxu0 0.0
  %159 = vmatmul.mubr.f32.gmra.mrb[0].mxu0 %v79
  %v160 = vpop.f32.mrb[0].mxu0
  %v161 = vadd.f32 0.0, %v160
  %v162 = vpop.f32.mrb[0].mxu0
  %163 = vmatprep.mubr.f32.mxu0 0.0
  %164 = vmatmul.mubr.f32.gmra.mrb[0].mxu0 %v82
  %v165 = vpop.f32.mrb[0].mxu0
  %v166 = vadd.f32 0.0, %v165
  %v167 = vpop.f32.mrb[0].mxu0
  %168 = vdwg.mxu0
  %v169 = vld [vmem:[%s3] sm:$0xff]
  %v170 = vld [vmem:[%s3 + $0x8] sm:$0xff]
  %v171 = vld [vmem:[%s3 + $0x10] sm:$0xff]
  %v172 = vld [vmem:[%s3 + $0x18] sm:$0xff]
  %vm173 = vcmask 261120
  %v175 = vsel %vm173, %v29, 0
  %v178 = vsel %vm173, %v30, 0
  %v181 = vsel %vm173, %v31, 0
  %v184 = vsel %vm173, %v32, 0
  %v187 = vsel %vm173, %v33, 0
  %v190 = vsel %vm173, %v34, 0
  %v193 = vsel %vm173, %v35, 0
  %v196 = vsel %vm173, %v36, 0
  %198 = vmatprep.subr.mxu0 0.0
  %199 = vmatpush1.msra.mxu0 %v169
  %200 = vmatprep.subr.mxu0 0.0
  %201 = vmatpush1.msra.mxu0 %v170
  %202 = vmatprep.subr.mxu0 0.0
  %203 = vmatpush1.msra.mxu0 %v171
  %204 = vmatprep.subr.mxu0 0.0
  %205 = vmatpush1.msra.mxu0 %v172
  %206 = vmatprep.subr.mxu0 0.0
  %207 = vmatpush1.msra.mxu0 0.0
  %208 = vmatprep.subr.mxu0 0.0
  %209 = vmatpush1.msra.mxu0 0.0
  %210 = vmatprep.subr.mxu0 0.0
  %211 = vmatpush1.msra.mxu0 0.0
  %212 = vmatprep.subr.mxu0 0.0
  %213 = vmatpush1.msra.mxu0 0.0
  %214 = vmatprep.subr.mxu0 0.0
  %215 = vmatpush1.msra.mxu0 0.0
  %216 = vmatprep.subr.mxu0 0.0
  %217 = vmatpush1.msra.mxu0 0.0
  %218 = vmatprep.subr.mxu0 0.0
  %219 = vmatpush1.msra.mxu0 0.0
  %220 = vmatprep.subr.mxu0 0.0
  %221 = vmatpush1.msra.mxu0 0.0
  %222 = vmatprep.subr.mxu0 0.0
  %223 = vmatpush1.msra.mxu0 0.0
  %224 = vmatprep.subr.mxu0 0.0
  %225 = vmatpush1.msra.mxu0 0.0
  %226 = vmatprep.subr.mxu0 0.0
  %227 = vmatpush1.msra.mxu0 0.0
  %228 = vmatprep.subr.mxu0 0.0
  %229 = vmatpush1.msra.mxu0 0.0
  %230 = vmatprep.subr.mxu0 0.0
  %231 = vmatpush1.msra.mxu0 0.0
  %232 = vmatprep.subr.mxu0 0.0
  %233 = vmatpush1.msra.mxu0 0.0
  %234 = vmatprep.subr.mxu0 0.0
  %235 = vmatpush1.msra.mxu0 0.0
  %236 = vmatprep.subr.mxu0 0.0
  %237 = vmatpush1.msra.mxu0 0.0
  %238 = vmatprep.subr.mxu0 0.0
  %239 = vmatpush1.msra.mxu0 0.0
  %240 = vmatprep.subr.mxu0 0.0
  %241 = vmatpush1.msra.mxu0 0.0
  %242 = vmatprep.subr.mxu0 0.0
  %243 = vmatpush1.msra.mxu0 0.0
  %244 = vmatprep.subr.mxu0 0.0
  %245 = vmatpush1.msra.mxu0 0.0
  %246 = vmatprep.subr.mxu0 0.0
  %247 = vmatpush1.msra.mxu0 0.0
  %248 = vmatprep.subr.mxu0 0.0
  %249 = vmatpush1.msra.mxu0 0.0
  %250 = vmatprep.subr.mxu0 0.0
  %251 = vmatpush1.msra.mxu0 0.0
  %252 = vmatprep.subr.mxu0 0.0
  %253 = vmatpush1.msra.mxu0 0.0
  %254 = vmatprep.subr.mxu0 0.0
  %255 = vmatpush1.msra.mxu0 0.0
  %256 = vmatprep.subr.mxu0 0.0
  %257 = vmatpush1.msra.mxu0 0.0
  %258 = vmatprep.subr.mxu0 0.0
  %259 = vmatpush1.msra.mxu0 0.0
  %260 = vmatprep.subr.mxu0 0.0
  %261 = vmatpush1.msra.mxu0 0.0
  %262 = vmatprep.mubr.f32.mxu0 0.0
  %263 = vmatmul.mubr.f32.gmra.mrb[0].mxu0 %v175
  %v264 = vpop.f32.mrb[0].mxu0
  %v265 = vadd.f32 0.0, %v264
  %v266 = vpop.f32.mrb[0].mxu0
  %267 = vmatprep.mubr.f32.mxu0 0.0
  %268 = vmatmul.mubr.f32.gmra.mrb[0].mxu0 %v178
  %v269 = vpop.f32.mrb[0].mxu0
  %v270 = vadd.f32 0.0, %v269
  %v271 = vpop.f32.mrb[0].mxu0
  %272 = vmatprep.mubr.f32.mxu0 0.0
  %273 = vmatmul.mubr.f32.gmra.mrb[0].mxu0 %v181
  %v274 = vpop.f32.mrb[0].mxu0
  %v275 = vadd.f32 0.0, %v274
  %v276 = vpop.f32.mrb[0].mxu0
  %277 = vmatprep.mubr.f32.mxu0 0.0
  %278 = vmatmul.mubr.f32.gmra.mrb[0].mxu0 %v184
  %v279 = vpop.f32.mrb[0].mxu0
  %v280 = vadd.f32 0.0, %v279
  %v281 = vpop.f32.mrb[0].mxu0
  %282 = vmatprep.mubr.f32.mxu0 0.0
  %283 = vmatmul.mubr.f32.gmra.mrb[0].mxu0 %v187
  %v284 = vpop.f32.mrb[0].mxu0
  %v285 = vadd.f32 0.0, %v284
  %v286 = vpop.f32.mrb[0].mxu0
  %287 = vmatprep.mubr.f32.mxu0 0.0
  %288 = vmatmul.mubr.f32.gmra.mrb[0].mxu0 %v190
  %v289 = vpop.f32.mrb[0].mxu0
  %v290 = vadd.f32 0.0, %v289
  %v291 = vpop.f32.mrb[0].mxu0
  %292 = vmatprep.mubr.f32.mxu0 0.0
  %293 = vmatmul.mubr.f32.gmra.mrb[0].mxu0 %v193
  %v294 = vpop.f32.mrb[0].mxu0
  %v295 = vadd.f32 0.0, %v294
  %v296 = vpop.f32.mrb[0].mxu0
  %297 = vmatprep.mubr.f32.mxu0 0.0
  %298 = vmatmul.mubr.f32.gmra.mrb[0].mxu0 %v196
  %v299 = vpop.f32.mrb[0].mxu0
  %v300 = vadd.f32 0.0, %v299
  %v301 = vpop.f32.mrb[0].mxu0
  %302 = vdwg.mxu0
  %v304 = vsel %vm173, %v151, 0
  %v307 = vsel %vm173, %v156, 0
  %v310 = vsel %vm173, %v161, 0
  %v313 = vsel %vm173, %v166, 0
  %315 = vmatprep.subr.mxu0 0.0
  %316 = vmatpush1.msra.mxu0 %v169
  %317 = vmatprep.subr.mxu0 0.0
  %318 = vmatpush1.msra.mxu0 %v170
  %319 = vmatprep.subr.mxu0 0.0
  %320 = vmatpush1.msra.mxu0 %v171
  %321 = vmatprep.subr.mxu0 0.0
  %322 = vmatpush1.msra.mxu0 %v172
  %323 = vmatprep.subr.mxu0 0.0
  %324 = vmatpush1.msra.mxu0 0.0
  %325 = vmatprep.subr.mxu0 0.0
  %326 = vmatpush1.msra.mxu0 0.0
  %327 = vmatprep.subr.mxu0 0.0
  %328 = vmatpush1.msra.mxu0 0.0
  %329 = vmatprep.subr.mxu0 0.0
  %330 = vmatpush1.msra.mxu0 0.0
  %331 = vmatprep.subr.mxu0 0.0
  %332 = vmatpush1.msra.mxu0 0.0
  %333 = vmatprep.subr.mxu0 0.0
  %334 = vmatpush1.msra.mxu0 0.0
  %335 = vmatprep.subr.mxu0 0.0
  %336 = vmatpush1.msra.mxu0 0.0
  %337 = vmatprep.subr.mxu0 0.0
  %338 = vmatpush1.msra.mxu0 0.0
  %339 = vmatprep.subr.mxu0 0.0
  %340 = vmatpush1.msra.mxu0 0.0
  %341 = vmatprep.subr.mxu0 0.0
  %342 = vmatpush1.msra.mxu0 0.0
  %343 = vmatprep.subr.mxu0 0.0
  %344 = vmatpush1.msra.mxu0 0.0
  %345 = vmatprep.subr.mxu0 0.0
  %346 = vmatpush1.msra.mxu0 0.0
  %347 = vmatprep.subr.mxu0 0.0
  %348 = vmatpush1.msra.mxu0 0.0
  %349 = vmatprep.subr.mxu0 0.0
  %350 = vmatpush1.msra.mxu0 0.0
  %351 = vmatprep.subr.mxu0 0.0
  %352 = vmatpush1.msra.mxu0 0.0
  %353 = vmatprep.subr.mxu0 0.0
  %354 = vmatpush1.msra.mxu0 0.0
  %355 = vmatprep.subr.mxu0 0.0
  %356 = vmatpush1.msra.mxu0 0.0
  %357 = vmatprep.subr.mxu0 0.0
  %358 = vmatpush1.msra.mxu0 0.0
  %359 = vmatprep.subr.mxu0 0.0
  %360 = vmatpush1.msra.mxu0 0.0
  %361 = vmatprep.subr.mxu0 0.0
  %362 = vmatpush1.msra.mxu0 0.0
  %363 = vmatprep.subr.mxu0 0.0
  %364 = vmatpush1.msra.mxu0 0.0
  %365 = vmatprep.subr.mxu0 0.0
  %366 = vmatpush1.msra.mxu0 0.0
  %367 = vmatprep.subr.mxu0 0.0
  %368 = vmatpush1.msra.mxu0 0.0
  %369 = vmatprep.subr.mxu0 0.0
  %370 = vmatpush1.msra.mxu0 0.0
  %371 = vmatprep.subr.mxu0 0.0
  %372 = vmatpush1.msra.mxu0 0.0
  %373 = vmatprep.subr.mxu0 0.0
  %374 = vmatpush1.msra.mxu0 0.0
  %375 = vmatprep.subr.mxu0 0.0
  %376 = vmatpush1.msra.mxu0 0.0
  %377 = vmatprep.subr.mxu0 0.0
  %378 = vmatpush1.msra.mxu0 0.0
  %379 = vmatprep.mubr.f32.mxu0 0.0
  %380 = vmatmul.mubr.f32.gmra.mrb[0].mxu0 %v304
  %v381 = vpop.f32.mrb[0].mxu0
  %v382 = vadd.f32 0.0, %v381
  %v383 = vpop.f32.mrb[0].mxu0
  %384 = vmatprep.mubr.f32.mxu0 0.0
  %385 = vmatmul.mubr.f32.gmra.mrb[0].mxu0 %v307
  %v386 = vpop.f32.mrb[0].mxu0
  %v387 = vadd.f32 0.0, %v386
  %v388 = vpop.f32.mrb[0].mxu0
  %389 = vmatprep.mubr.f32.mxu0 0.0
  %390 = vmatmul.mubr.f32.gmra.mrb[0].mxu0 %v310
  %v391 = vpop.f32.mrb[0].mxu0
  %v392 = vadd.f32 0.0, %v391
  %v393 = vpop.f32.mrb[0].mxu0
  %394 = vmatprep.mubr.f32.mxu0 0.0
  %395 = vmatmul.mubr.f32.gmra.mrb[0].mxu0 %v313
  %v396 = vpop.f32.mrb[0].mxu0
  %v397 = vadd.f32 0.0, %v396
  %v398 = vpop.f32.mrb[0].mxu0
  %399 = vdwg.mxu0
  %400 = vset.pattern.permute.xlu0 0
  %401 = vperm.xlu0 %400, %v41
  %v402 = vpop.permute.xlu0 %401
  %403 = vset.pattern.permute.xlu0 0
  %404 = vperm.xlu0 %403, %v42
  %v405 = vpop.permute.xlu0 %404
  %406 = vset.pattern.permute.xlu0 0
  %407 = vperm.xlu0 %406, %v43
  %v408 = vpop.permute.xlu0 %407
  %409 = vset.pattern.permute.xlu0 0
  %410 = vperm.xlu0 %409, %v44
  %v411 = vpop.permute.xlu0 %410
  %vm412 = vcmp.eq.s32.totalorder %v402, %v46
  %vm413 = vcmp.eq.s32.totalorder %v405, %v46
  %vm414 = vcmp.eq.s32.totalorder %v408, %v46
  %vm415 = vcmp.eq.s32.totalorder %v411, %v46
  %416 = vset.pattern.permute.xlu0 1
  %417 = vperm.xlu0 %416, %v41
  %v418 = vpop.permute.xlu0 %417
  %419 = vset.pattern.permute.xlu0 1
  %420 = vperm.xlu0 %419, %v42
  %v421 = vpop.permute.xlu0 %420
  %422 = vset.pattern.permute.xlu0 1
  %423 = vperm.xlu0 %422, %v43
  %v424 = vpop.permute.xlu0 %423
  %425 = vset.pattern.permute.xlu0 1
  %426 = vperm.xlu0 %425, %v44
  %v427 = vpop.permute.xlu0 %426
  %vm428 = vcmp.eq.s32.totalorder %v418, %v46
  %vm429 = vcmp.eq.s32.totalorder %v421, %v46
  %vm430 = vcmp.eq.s32.totalorder %v424, %v46
  %vm431 = vcmp.eq.s32.totalorder %v427, %v46
  %vm432 = vmor %vm412, %vm428
  %vm433 = vmor %vm413, %vm429
  %vm434 = vmor %vm414, %vm430
  %vm435 = vmor %vm415, %vm431
  %436 = vset.pattern.permute.xlu0 2
  %437 = vperm.xlu0 %436, %v41
  %v438 = vpop.permute.xlu0 %437
  %439 = vset.pattern.permute.xlu0 2
  %440 = vperm.xlu0 %439, %v42
  %v441 = vpop.permute.xlu0 %440
  %442 = vset.pattern.permute.xlu0 2
  %443 = vperm.xlu0 %442, %v43
  %v444 = vpop.permute.xlu0 %443
  %445 = vset.pattern.permute.xlu0 2
  %446 = vperm.xlu0 %445, %v44
  %v447 = vpop.permute.xlu0 %446
  %vm448 = vcmp.eq.s32.totalorder %v438, %v46
  %vm449 = vcmp.eq.s32.totalorder %v441, %v46
  %vm450 = vcmp.eq.s32.totalorder %v444, %v46
  %vm451 = vcmp.eq.s32.totalorder %v447, %v46
  %vm452 = vmor %vm432, %vm448
  %vm453 = vmor %vm433, %vm449
  %vm454 = vmor %vm434, %vm450
  %vm455 = vmor %vm435, %vm451
  %456 = vset.pattern.permute.xlu0 3
  %457 = vperm.xlu0 %456, %v41
  %v458 = vpop.permute.xlu0 %457
  %459 = vset.pattern.permute.xlu0 3
  %460 = vperm.xlu0 %459, %v42
  %v461 = vpop.permute.xlu0 %460
  %462 = vset.pattern.permute.xlu0 3
  %463 = vperm.xlu0 %462, %v43
  %v464 = vpop.permute.xlu0 %463
  %465 = vset.pattern.permute.xlu0 3
  %466 = vperm.xlu0 %465, %v44
  %v467 = vpop.permute.xlu0 %466
  %vm468 = vcmp.eq.s32.totalorder %v458, %v46
  %vm469 = vcmp.eq.s32.totalorder %v461, %v46
  %vm470 = vcmp.eq.s32.totalorder %v464, %v46
  %vm471 = vcmp.eq.s32.totalorder %v467, %v46
  %vm472 = vmor %vm452, %vm468
  %vm473 = vmor %vm453, %vm469
  %vm474 = vmor %vm454, %vm470
  %vm475 = vmor %vm455, %vm471
  %484 = vrot.lane.b32.xlu0 %v265, 96
  %v485 = vpop.permute.xlu0 %484
  %486 = vrot.lane.b32.xlu0 %v270, 96
  %v487 = vpop.permute.xlu0 %486
  %488 = vrot.lane.b32.xlu0 %v275, 96
  %v489 = vpop.permute.xlu0 %488
  %490 = vrot.lane.b32.xlu0 %v280, 96
  %v491 = vpop.permute.xlu0 %490
  %492 = vrot.lane.b32.xlu0 %v285, 96
  %v493 = vpop.permute.xlu0 %492
  %494 = vrot.lane.b32.xlu0 %v290, 96
  %v495 = vpop.permute.xlu0 %494
  %496 = vrot.lane.b32.xlu0 %v295, 96
  %v497 = vpop.permute.xlu0 %496
  %498 = vrot.lane.b32.xlu0 %v300, 96
  %v499 = vpop.permute.xlu0 %498
  %v501 = vsel %vm173, %v382, 0
  %v504 = vsel %vm173, %v387, 0
  %v507 = vsel %vm173, %v392, 0
  %v510 = vsel %vm173, %v397, 0
  %v512 = vsel %vm173, %v485, 0
  %v514 = vsel %vm173, %v487, 0
  %v516 = vsel %vm173, %v489, 0
  %v518 = vsel %vm173, %v491, 0
  %v520 = vsel %vm173, %v493, 0
  %v522 = vsel %vm173, %v495, 0
  %v524 = vsel %vm173, %v497, 0
  %v526 = vsel %vm173, %v499, 0
  %528 = vmatprep.subr.mxu0 0.0
  %529 = vmatpush1.xpose.msra.mxu0 %v512
  %530 = vmatprep.subr.mxu0 0.0
  %531 = vmatpush1.xpose.msra.mxu0 %v514
  %532 = vmatprep.subr.mxu0 0.0
  %533 = vmatpush1.xpose.msra.mxu0 %v516
  %534 = vmatprep.subr.mxu0 0.0
  %535 = vmatpush1.xpose.msra.mxu0 %v518
  %536 = vmatprep.subr.mxu0 0.0
  %537 = vmatpush1.xpose.msra.mxu0 %v520
  %538 = vmatprep.subr.mxu0 0.0
  %539 = vmatpush1.xpose.msra.mxu0 %v522
  %540 = vmatprep.subr.mxu0 0.0
  %541 = vmatpush1.xpose.msra.mxu0 %v524
  %542 = vmatprep.subr.mxu0 0.0
  %543 = vmatpush1.xpose.msra.mxu0 %v526
  %544 = vmatprep.subr.mxu0 0.0
  %545 = vmatpush1.xpose.msra.mxu0 0.0
  %546 = vmatprep.subr.mxu0 0.0
  %547 = vmatpush1.xpose.msra.mxu0 0.0
  %548 = vmatprep.subr.mxu0 0.0
  %549 = vmatpush1.xpose.msra.mxu0 0.0
  %550 = vmatprep.subr.mxu0 0.0
  %551 = vmatpush1.xpose.msra.mxu0 0.0
  %552 = vmatprep.subr.mxu0 0.0
  %553 = vmatpush1.xpose.msra.mxu0 0.0
  %554 = vmatprep.subr.mxu0 0.0
  %555 = vmatpush1.xpose.msra.mxu0 0.0
  %556 = vmatprep.subr.mxu0 0.0
  %557 = vmatpush1.xpose.msra.mxu0 0.0
  %558 = vmatprep.subr.mxu0 0.0
  %559 = vmatpush1.xpose.msra.mxu0 0.0
  %560 = vmatprep.subr.mxu0 0.0
  %561 = vmatpush1.xpose.msra.mxu0 0.0
  %562 = vmatprep.subr.mxu0 0.0
  %563 = vmatpush1.xpose.msra.mxu0 0.0
  %564 = vmatprep.subr.mxu0 0.0
  %565 = vmatpush1.xpose.msra.mxu0 0.0
  %566 = vmatprep.subr.mxu0 0.0
  %567 = vmatpush1.xpose.msra.mxu0 0.0
  %568 = vmatprep.subr.mxu0 0.0
  %569 = vmatpush1.xpose.msra.mxu0 0.0
  %570 = vmatprep.subr.mxu0 0.0
  %571 = vmatpush1.xpose.msra.mxu0 0.0
  %572 = vmatprep.subr.mxu0 0.0
  %573 = vmatpush1.xpose.msra.mxu0 0.0
  %574 = vmatprep.subr.mxu0 0.0
  %575 = vmatpush1.xpose.msra.mxu0 0.0
  %576 = vmatprep.subr.mxu0 0.0
  %577 = vmatpush1.xpose.msra.mxu0 0.0
  %578 = vmatprep.subr.mxu0 0.0
  %579 = vmatpush1.xpose.msra.mxu0 0.0
  %580 = vmatprep.subr.mxu0 0.0
  %581 = vmatpush1.xpose.msra.mxu0 0.0
  %582 = vmatprep.subr.mxu0 0.0
  %583 = vmatpush1.xpose.msra.mxu0 0.0
  %584 = vmatprep.subr.mxu0 0.0
  %585 = vmatpush1.xpose.msra.mxu0 0.0
  %586 = vmatprep.subr.mxu0 0.0
  %587 = vmatpush1.xpose.msra.mxu0 0.0
  %588 = vmatprep.subr.mxu0 0.0
  %589 = vmatpush1.xpose.msra.mxu0 0.0
  %590 = vmatprep.subr.mxu0 0.0
  %591 = vmatpush1.xpose.msra.mxu0 0.0
  %592 = vmatprep.mubr.f32.mxu0 0.0
  %593 = vmatmul.mubr.f32.gmra.mrb[0].mxu0 %v501
  %v594 = vpop.f32.mrb[0].mxu0
  %v595 = vadd.f32 0.0, %v594
  %v596 = vpop.f32.mrb[0].mxu0
  %597 = vmatprep.mubr.f32.mxu0 0.0
  %598 = vmatmul.mubr.f32.gmra.mrb[0].mxu0 %v504
  %v599 = vpop.f32.mrb[0].mxu0
  %v600 = vadd.f32 0.0, %v599
  %v601 = vpop.f32.mrb[0].mxu0
  %602 = vmatprep.mubr.f32.mxu0 0.0
  %603 = vmatmul.mubr.f32.gmra.mrb[0].mxu0 %v507
  %v604 = vpop.f32.mrb[0].mxu0
  %v605 = vadd.f32 0.0, %v604
  %v606 = vpop.f32.mrb[0].mxu0
  %607 = vmatprep.mubr.f32.mxu0 0.0
  %608 = vmatmul.mubr.f32.gmra.mrb[0].mxu0 %v510
  %v609 = vpop.f32.mrb[0].mxu0
  %v610 = vadd.f32 0.0, %v609
  %v611 = vpop.f32.mrb[0].mxu0
  %612 = vdwg.mxu0
  %v613 = vsel %vm472, %v595, -1e+30
  %v614 = vsel %vm473, %v600, -1e+30
  %v615 = vsel %vm474, %v605, -1e+30
  %v616 = vsel %vm475, %v610, -1e+30
  %v617 = vsel %vm71, %v613, -inf
  %618 = vmax.xlane.f32.xlu0 %v617
  %v619 = vpop.xlane.xlu0 %618
  %v620 = vsel %vm71, %v614, -inf
  %621 = vmax.xlane.f32.xlu0 %v620
  %v622 = vpop.xlane.xlu0 %621
  %v623 = vsel %vm71, %v615, -inf
  %624 = vmax.xlane.f32.xlu0 %v623
  %v625 = vpop.xlane.xlu0 %624
  %v626 = vsel %vm71, %v616, -inf
  %627 = vmax.xlane.f32.xlu0 %v626
  %v628 = vpop.xlane.xlu0 %627
  %v629 = vsub.f32 %v613, %v619
  %v630 = vsub.f32 %v614, %v622
  %v631 = vsub.f32 %v615, %v625
  %v632 = vsub.f32 %v616, %v628
  %v633 = vmul.f32 %v629, 1.442695
  %v634 = vpow.pop %v633
  %v635 = vmul.f32 %v630, 1.442695
  %v636 = vpow.pop %v635
  %v637 = vmul.f32 %v631, 1.442695
  %v638 = vpow.pop %v637
  %v639 = vmul.f32 %v632, 1.442695
  %v640 = vpow.pop %v639
  %v641 = vsel %vm71, %v634, 0.0
  %642 = vadd.xlane.f32.xlu0 %v641
  %v643 = vpop.xlane.xlu0 %642
  %v644 = vsel %vm71, %v636, 0.0
  %645 = vadd.xlane.f32.xlu0 %v644
  %v646 = vpop.xlane.xlu0 %645
  %v647 = vsel %vm71, %v638, 0.0
  %648 = vadd.xlane.f32.xlu0 %v647
  %v649 = vpop.xlane.xlu0 %648
  %v650 = vsel %vm71, %v640, 0.0
  %651 = vadd.xlane.f32.xlu0 %v650
  %v652 = vpop.xlane.xlu0 %651
  %v653 = vrcp.pop %v643
  %v654 = vrcp.pop %v646
  %v655 = vrcp.pop %v649
  %v656 = vrcp.pop %v652
  %v657 = vmul.f32 %v634, %v653
  %v658 = vmul.f32 %v636, %v654
  %v659 = vmul.f32 %v638, %v655
  %v660 = vmul.f32 %v640, %v656
  %661 = vrot.lane.b32.xlu0 %v265, 64
  %v662 = vpop.permute.xlu0 %661
  %663 = vrot.lane.b32.xlu0 %v270, 64
  %v664 = vpop.permute.xlu0 %663
  %665 = vrot.lane.b32.xlu0 %v275, 64
  %v666 = vpop.permute.xlu0 %665
  %667 = vrot.lane.b32.xlu0 %v280, 64
  %v668 = vpop.permute.xlu0 %667
  %669 = vrot.lane.b32.xlu0 %v285, 64
  %v670 = vpop.permute.xlu0 %669
  %671 = vrot.lane.b32.xlu0 %v290, 64
  %v672 = vpop.permute.xlu0 %671
  %673 = vrot.lane.b32.xlu0 %v295, 64
  %v674 = vpop.permute.xlu0 %673
  %675 = vrot.lane.b32.xlu0 %v300, 64
  %v676 = vpop.permute.xlu0 %675
  %v686 = vsel %vm71, %v657, 0
  %v689 = vsel %vm71, %v658, 0
  %v692 = vsel %vm71, %v659, 0
  %v695 = vsel %vm71, %v660, 0
  %697 = vmatprep.subr.mxu0 0.0
  %698 = vmatpush1.msra.mxu0 %v662
  %699 = vmatprep.subr.mxu0 0.0
  %700 = vmatpush1.msra.mxu0 %v664
  %701 = vmatprep.subr.mxu0 0.0
  %702 = vmatpush1.msra.mxu0 %v666
  %703 = vmatprep.subr.mxu0 0.0
  %704 = vmatpush1.msra.mxu0 %v668
  %705 = vmatprep.subr.mxu0 0.0
  %706 = vmatpush1.msra.mxu0 %v670
  %707 = vmatprep.subr.mxu0 0.0
  %708 = vmatpush1.msra.mxu0 %v672
  %709 = vmatprep.subr.mxu0 0.0
  %710 = vmatpush1.msra.mxu0 %v674
  %711 = vmatprep.subr.mxu0 0.0
  %712 = vmatpush1.msra.mxu0 %v676
  %713 = vmatprep.subr.mxu0 0.0
  %714 = vmatpush1.msra.mxu0 0.0
  %715 = vmatprep.subr.mxu0 0.0
  %716 = vmatpush1.msra.mxu0 0.0
  %717 = vmatprep.subr.mxu0 0.0
  %718 = vmatpush1.msra.mxu0 0.0
  %719 = vmatprep.subr.mxu0 0.0
  %720 = vmatpush1.msra.mxu0 0.0
  %721 = vmatprep.subr.mxu0 0.0
  %722 = vmatpush1.msra.mxu0 0.0
  %723 = vmatprep.subr.mxu0 0.0
  %724 = vmatpush1.msra.mxu0 0.0
  %725 = vmatprep.subr.mxu0 0.0
  %726 = vmatpush1.msra.mxu0 0.0
  %727 = vmatprep.subr.mxu0 0.0
  %728 = vmatpush1.msra.mxu0 0.0
  %729 = vmatprep.subr.mxu0 0.0
  %730 = vmatpush1.msra.mxu0 0.0
  %731 = vmatprep.subr.mxu0 0.0
  %732 = vmatpush1.msra.mxu0 0.0
  %733 = vmatprep.subr.mxu0 0.0
  %734 = vmatpush1.msra.mxu0 0.0
  %735 = vmatprep.subr.mxu0 0.0
  %736 = vmatpush1.msra.mxu0 0.0
  %737 = vmatprep.subr.mxu0 0.0
  %738 = vmatpush1.msra.mxu0 0.0
  %739 = vmatprep.subr.mxu0 0.0
  %740 = vmatpush1.msra.mxu0 0.0
  %741 = vmatprep.subr.mxu0 0.0
  %742 = vmatpush1.msra.mxu0 0.0
  %743 = vmatprep.subr.mxu0 0.0
  %744 = vmatpush1.msra.mxu0 0.0
  %745 = vmatprep.subr.mxu0 0.0
  %746 = vmatpush1.msra.mxu0 0.0
  %747 = vmatprep.subr.mxu0 0.0
  %748 = vmatpush1.msra.mxu0 0.0
  %749 = vmatprep.subr.mxu0 0.0
  %750 = vmatpush1.msra.mxu0 0.0
  %751 = vmatprep.subr.mxu0 0.0
  %752 = vmatpush1.msra.mxu0 0.0
  %753 = vmatprep.subr.mxu0 0.0
  %754 = vmatpush1.msra.mxu0 0.0
  %755 = vmatprep.subr.mxu0 0.0
  %756 = vmatpush1.msra.mxu0 0.0
  %757 = vmatprep.subr.mxu0 0.0
  %758 = vmatpush1.msra.mxu0 0.0
  %759 = vmatprep.subr.mxu0 0.0
  %760 = vmatpush1.msra.mxu0 0.0
  %761 = vmatprep.mubr.f32.mxu0 0.0
  %762 = vmatmul.mubr.f32.gmra.mrb[0].mxu0 %v686
  %v763 = vpop.f32.mrb[0].mxu0
  %v764 = vadd.f32 %v151, %v763
  %v765 = vpop.f32.mrb[0].mxu0
  %766 = vmatprep.mubr.f32.mxu0 0.0
  %767 = vmatmul.mubr.f32.gmra.mrb[0].mxu0 %v689
  %v768 = vpop.f32.mrb[0].mxu0
  %v769 = vadd.f32 %v156, %v768
  %v770 = vpop.f32.mrb[0].mxu0
  %771 = vmatprep.mubr.f32.mxu0 0.0
  %772 = vmatmul.mubr.f32.gmra.mrb[0].mxu0 %v692
  %v773 = vpop.f32.mrb[0].mxu0
  %v774 = vadd.f32 %v161, %v773
  %v775 = vpop.f32.mrb[0].mxu0
  %776 = vmatprep.mubr.f32.mxu0 0.0
  %777 = vmatmul.mubr.f32.gmra.mrb[0].mxu0 %v695
  %v778 = vpop.f32.mrb[0].mxu0
  %v779 = vadd.f32 %v166, %v778
  %v780 = vpop.f32.mrb[0].mxu0
  %781 = vdwg.mxu0
  %v782 = vsel %vm173, %v764, 0.0
  %v783 = vsel %vm173, %v769, 0.0
  %v784 = vadd.f32 %v782, %v783
  %v785 = vsel %vm173, %v774, 0.0
  %v786 = vadd.f32 %v784, %v785
  %v787 = vsel %vm173, %v779, 0.0
  %v788 = vadd.f32 %v786, %v787
  %v789 = vrot.slane %v788, 4
  %v790 = vadd.f32 %v788, %v789
  %v791 = vrot.slane %v790, 2
  %v792 = vadd.f32 %v790, %v791
  %v793 = vrot.slane %v792, 1
  %v794 = vadd.f32 %v792, %v793
  %v795 = vrcp.pop 32.0
  %v796 = vmul.f32 %v794, %v795
  %v797 = vsub.f32 %v764, %v796
  %v798 = vsub.f32 %v769, %v796
  %v799 = vsub.f32 %v774, %v796
  %v800 = vsub.f32 %v779, %v796
  %v801 = vmul.f32 %v797, %v797
  %v802 = vmul.f32 %v798, %v798
  %v803 = vmul.f32 %v799, %v799
  %v804 = vmul.f32 %v800, %v800
  %v805 = vsel %vm173, %v801, 0.0
  %v806 = vsel %vm173, %v802, 0.0
  %v807 = vadd.f32 %v805, %v806
  %v808 = vsel %vm173, %v803, 0.0
  %v809 = vadd.f32 %v807, %v808
  %v810 = vsel %vm173, %v804, 0.0
  %v811 = vadd.f32 %v809, %v810
  %v812 = vrot.slane %v811, 4
  %v813 = vadd.f32 %v811, %v812
  %v814 = vrot.slane %v813, 2
  %v815 = vadd.f32 %v813, %v814
  %v816 = vrot.slane %v815, 1
  %v817 = vadd.f32 %v815, %v816
  %v818 = vmul.f32 %v817, %v795
  %v819 = vadd.f32 %v818, 1e-05
  %v820 = vrsqrt.pop %v819
  %v821 = vmul.f32 %v797, %v820
  %v822 = vmul.f32 %v798, %v820
  %v823 = vmul.f32 %v799, %v820
  %v824 = vmul.f32 %v800, %v820
  %v825 = vld [vmem:[%s4] sm:$0xff]
  %v826 = vld [vmem:[%s4 + $0x8] sm:$0xff]
  %v827 = vld [vmem:[%s4 + $0x10] sm:$0xff]
  %v828 = vld [vmem:[%s4 + $0x18] sm:$0xff]
  %v829 = vld [vmem:[%s5] sm:$0x1]
  %v831 = vlaneseq
  %v832 = vshrl.u32 %v831, 7
  %v833 = vsub.s32 0, %v832
  %v834 = vrot.slane %v829, %v833
  %v837 = vsel %vm173, %v821, 0
  %v840 = vsel %vm173, %v822, 0
  %v843 = vsel %vm173, %v823, 0
  %v846 = vsel %vm173, %v824, 0
  %848 = vmatprep.subr.mxu0 0.0
  %849 = vmatpush1.msra.mxu0 %v825
  %850 = vmatprep.subr.mxu0 0.0
  %851 = vmatpush1.msra.mxu0 %v826
  %852 = vmatprep.subr.mxu0 0.0
  %853 = vmatpush1.msra.mxu0 %v827
  %854 = vmatprep.subr.mxu0 0.0
  %855 = vmatpush1.msra.mxu0 %v828
  %856 = vmatprep.subr.mxu0 0.0
  %857 = vmatpush1.msra.mxu0 0.0
  %858 = vmatprep.subr.mxu0 0.0
  %859 = vmatpush1.msra.mxu0 0.0
  %860 = vmatprep.subr.mxu0 0.0
  %861 = vmatpush1.msra.mxu0 0.0
  %862 = vmatprep.subr.mxu0 0.0
  %863 = vmatpush1.msra.mxu0 0.0
  %864 = vmatprep.subr.mxu0 0.0
  %865 = vmatpush1.msra.mxu0 0.0
  %866 = vmatprep.subr.mxu0 0.0
  %867 = vmatpush1.msra.mxu0 0.0
  %868 = vmatprep.subr.mxu0 0.0
  %869 = vmatpush1.msra.mxu0 0.0
  %870 = vmatprep.subr.mxu0 0.0
  %871 = vmatpush1.msra.mxu0 0.0
  %872 = vmatprep.subr.mxu0 0.0
  %873 = vmatpush1.msra.mxu0 0.0
  %874 = vmatprep.subr.mxu0 0.0
  %875 = vmatpush1.msra.mxu0 0.0
  %876 = vmatprep.subr.mxu0 0.0
  %877 = vmatpush1.msra.mxu0 0.0
  %878 = vmatprep.subr.mxu0 0.0
  %879 = vmatpush1.msra.mxu0 0.0
  %880 = vmatprep.subr.mxu0 0.0
  %881 = vmatpush1.msra.mxu0 0.0
  %882 = vmatprep.subr.mxu0 0.0
  %883 = vmatpush1.msra.mxu0 0.0
  %884 = vmatprep.subr.mxu0 0.0
  %885 = vmatpush1.msra.mxu0 0.0
  %886 = vmatprep.subr.mxu0 0.0
  %887 = vmatpush1.msra.mxu0 0.0
  %888 = vmatprep.subr.mxu0 0.0
  %889 = vmatpush1.msra.mxu0 0.0
  %890 = vmatprep.subr.mxu0 0.0
  %891 = vmatpush1.msra.mxu0 0.0
  %892 = vmatprep.subr.mxu0 0.0
  %893 = vmatpush1.msra.mxu0 0.0
  %894 = vmatprep.subr.mxu0 0.0
  %895 = vmatpush1.msra.mxu0 0.0
  %896 = vmatprep.subr.mxu0 0.0
  %897 = vmatpush1.msra.mxu0 0.0
  %898 = vmatprep.subr.mxu0 0.0
  %899 = vmatpush1.msra.mxu0 0.0
  %900 = vmatprep.subr.mxu0 0.0
  %901 = vmatpush1.msra.mxu0 0.0
  %902 = vmatprep.subr.mxu0 0.0
  %903 = vmatpush1.msra.mxu0 0.0
  %904 = vmatprep.subr.mxu0 0.0
  %905 = vmatpush1.msra.mxu0 0.0
  %906 = vmatprep.subr.mxu0 0.0
  %907 = vmatpush1.msra.mxu0 0.0
  %908 = vmatprep.subr.mxu0 0.0
  %909 = vmatpush1.msra.mxu0 0.0
  %910 = vmatprep.subr.mxu0 0.0
  %911 = vmatpush1.msra.mxu0 0.0
  %912 = vmatprep.mubr.f32.mxu0 0.0
  %913 = vmatmul.mubr.f32.gmra.mrb[0].mxu0 %v837
  %v914 = vpop.f32.mrb[0].mxu0
  %v915 = vadd.f32 %v834, %v914
  %v916 = vpop.f32.mrb[0].mxu0
  %917 = vmatprep.mubr.f32.mxu0 0.0
  %918 = vmatmul.mubr.f32.gmra.mrb[0].mxu0 %v840
  %v919 = vpop.f32.mrb[0].mxu0
  %v920 = vadd.f32 %v834, %v919
  %v921 = vpop.f32.mrb[0].mxu0
  %922 = vmatprep.mubr.f32.mxu0 0.0
  %923 = vmatmul.mubr.f32.gmra.mrb[0].mxu0 %v843
  %v924 = vpop.f32.mrb[0].mxu0
  %v925 = vadd.f32 %v834, %v924
  %v926 = vpop.f32.mrb[0].mxu0
  %927 = vmatprep.mubr.f32.mxu0 0.0
  %928 = vmatmul.mubr.f32.gmra.mrb[0].mxu0 %v846
  %v929 = vpop.f32.mrb[0].mxu0
  %v930 = vadd.f32 %v834, %v929
  %v931 = vpop.f32.mrb[0].mxu0
  %932 = vdwg.mxu0
  %v933 = vmax.f32 %v915, 0.0
  %v934 = vmax.f32 %v920, 0.0
  %v935 = vmax.f32 %v925, 0.0
  %v936 = vmax.f32 %v930, 0.0
  %v937 = vld [vmem:[%s6] sm:$0xff]
  %v938 = vld [vmem:[%s6 + $0x8] sm:$0xff]
  %v939 = vld [vmem:[%s6 + $0x10] sm:$0xff]
  %v940 = vld [vmem:[%s6 + $0x18] sm:$0xff]
  %v941 = vld [vmem:[%s6 + $0x20] sm:$0xff]
  %v942 = vld [vmem:[%s6 + $0x28] sm:$0xff]
  %v943 = vld [vmem:[%s6 + $0x30] sm:$0xff]
  %v944 = vld [vmem:[%s6 + $0x38] sm:$0xff]
  %v945 = vld [vmem:[%s7] sm:$0x1]
  %v947 = vlaneseq
  %v948 = vshrl.u32 %v947, 7
  %v949 = vsub.s32 0, %v948
  %v950 = vrot.slane %v945, %v949
  %v953 = vsel %vm71, %v933, 0
  %v956 = vsel %vm71, %v934, 0
  %v959 = vsel %vm71, %v935, 0
  %v962 = vsel %vm71, %v936, 0
  %964 = vmatprep.subr.mxu0 0.0
  %965 = vmatpush1.msra.mxu0 %v937
  %966 = vmatprep.subr.mxu0 0.0
  %967 = vmatpush1.msra.mxu0 %v938
  %968 = vmatprep.subr.mxu0 0.0
  %969 = vmatpush1.msra.mxu0 %v939
  %970 = vmatprep.subr.mxu0 0.0
  %971 = vmatpush1.msra.mxu0 %v940
  %972 = vmatprep.subr.mxu0 0.0
  %973 = vmatpush1.msra.mxu0 %v941
  %974 = vmatprep.subr.mxu0 0.0
  %975 = vmatpush1.msra.mxu0 %v942
  %976 = vmatprep.subr.mxu0 0.0
  %977 = vmatpush1.msra.mxu0 %v943
  %978 = vmatprep.subr.mxu0 0.0
  %979 = vmatpush1.msra.mxu0 %v944
  %980 = vmatprep.subr.mxu0 0.0
  %981 = vmatpush1.msra.mxu0 0.0
  %982 = vmatprep.subr.mxu0 0.0
  %983 = vmatpush1.msra.mxu0 0.0
  %984 = vmatprep.subr.mxu0 0.0
  %985 = vmatpush1.msra.mxu0 0.0
  %986 = vmatprep.subr.mxu0 0.0
  %987 = vmatpush1.msra.mxu0 0.0
  %988 = vmatprep.subr.mxu0 0.0
  %989 = vmatpush1.msra.mxu0 0.0
  %990 = vmatprep.subr.mxu0 0.0
  %991 = vmatpush1.msra.mxu0 0.0
  %992 = vmatprep.subr.mxu0 0.0
  %993 = vmatpush1.msra.mxu0 0.0
  %994 = vmatprep.subr.mxu0 0.0
  %995 = vmatpush1.msra.mxu0 0.0
  %996 = vmatprep.subr.mxu0 0.0
  %997 = vmatpush1.msra.mxu0 0.0
  %998 = vmatprep.subr.mxu0 0.0
  %999 = vmatpush1.msra.mxu0 0.0
  %1000 = vmatprep.subr.mxu0 0.0
  %1001 = vmatpush1.msra.mxu0 0.0
  %1002 = vmatprep.subr.mxu0 0.0
  %1003 = vmatpush1.msra.mxu0 0.0
  %1004 = vmatprep.subr.mxu0 0.0
  %1005 = vmatpush1.msra.mxu0 0.0
  %1006 = vmatprep.subr.mxu0 0.0
  %1007 = vmatpush1.msra.mxu0 0.0
  %1008 = vmatprep.subr.mxu0 0.0
  %1009 = vmatpush1.msra.mxu0 0.0
  %1010 = vmatprep.subr.mxu0 0.0
  %1011 = vmatpush1.msra.mxu0 0.0
  %1012 = vmatprep.subr.mxu0 0.0
  %1013 = vmatpush1.msra.mxu0 0.0
  %1014 = vmatprep.subr.mxu0 0.0
  %1015 = vmatpush1.msra.mxu0 0.0
  %1016 = vmatprep.subr.mxu0 0.0
  %1017 = vmatpush1.msra.mxu0 0.0
  %1018 = vmatprep.subr.mxu0 0.0
  %1019 = vmatpush1.msra.mxu0 0.0
  %1020 = vmatprep.subr.mxu0 0.0
  %1021 = vmatpush1.msra.mxu0 0.0
  %1022 = vmatprep.subr.mxu0 0.0
  %1023 = vmatpush1.msra.mxu0 0.0
  %1024 = vmatprep.subr.mxu0 0.0
  %1025 = vmatpush1.msra.mxu0 0.0
  %1026 = vmatprep.subr.mxu0 0.0
  %1027 = vmatpush1.msra.mxu0 0.0
  %1028 = vmatprep.mubr.f32.mxu0 0.0
  %1029 = vmatmul.mubr.f32.gmra.mrb[0].mxu0 %v953
  %v1030 = vpop.f32.mrb[0].mxu0
  %v1031 = vadd.f32 %v950, %v1030
  %v1032 = vpop.f32.mrb[0].mxu0
  %1033 = vmatprep.mubr.f32.mxu0 0.0
  %1034 = vmatmul.mubr.f32.gmra.mrb[0].mxu0 %v956
  %v1035 = vpop.f32.mrb[0].mxu0
  %v1036 = vadd.f32 %v950, %v1035
  %v1037 = vpop.f32.mrb[0].mxu0
  %1038 = vmatprep.mubr.f32.mxu0 0.0
  %1039 = vmatmul.mubr.f32.gmra.mrb[0].mxu0 %v959
  %v1040 = vpop.f32.mrb[0].mxu0
  %v1041 = vadd.f32 %v950, %v1040
  %v1042 = vpop.f32.mrb[0].mxu0
  %1043 = vmatprep.mubr.f32.mxu0 0.0
  %1044 = vmatmul.mubr.f32.gmra.mrb[0].mxu0 %v962
  %v1045 = vpop.f32.mrb[0].mxu0
  %v1046 = vadd.f32 %v950, %v1045
  %v1047 = vpop.f32.mrb[0].mxu0
  %1048 = vdwg.mxu0
  %v1049 = vadd.f32 %v1031, %v764
  %v1050 = vadd.f32 %v1036, %v769
  %v1051 = vadd.f32 %v1041, %v774
  %v1052 = vadd.f32 %v1046, %v779
  %1053 = vst.msk [vmem:[%s8] sm:$0xff] %vm173, %v1049
  %1054 = vst.msk [vmem:[%s8 + $0x8] sm:$0xff] %vm173, %v1050
  %1055 = vst.msk [vmem:[%s8 + $0x10] sm:$0xff] %vm173, %v1051
  %1056 = vst.msk [vmem:[%s8 + $0x18] sm:$0xff] %vm173, %v1052
  // Predicated region
  $region34: #{token_set_transformer_forward.3} parent=0 // pred_check
    _
  $region35: #{token_set_transformer_forward.3} parent=0 // pred_check_branch
    %1058 = sbr.rel (0) target = $region37
  $region36: #{token_set_transformer_forward.3} parent=0 // pred_region
    _
  $region37: #{token_set_transformer_forward.3} parent=0 // pred_fallthru
    _
  // Predicated region
  $region38: #{token_set_transformer_forward.3} parent=0 // pred_check
    _
  $region39: #{token_set_transformer_forward.3} parent=0 // pred_check_branch
    %1060 = sbr.rel (0) target = $region41
  $region40: #{token_set_transformer_forward.3} parent=0 // pred_region
    _
  $region41: #{token_set_transformer_forward.3} parent=0 // pred_fallthru
    _

// kernel: token_set_transformer_forward.4
$region0: #{token_set_transformer_forward.4}
  #allocation0 [shape = 'u32[]', space=smem, size = 0x4, offset = 0x4, fixed_abs, tag = 'smem constant byte address 0x4 - core index']
  #allocation1 [shape = 'u32[144,128]{1,0:T(1,128)}', space=vmem, size = 0x12000, scoped, tag = 'internal scratch']
  %s0 = inlined_call_operand.vmem [shape: f32[32,32], index: 0, kind: input, shape index: {}]
  %s1 = inlined_call_operand.vmem [shape: s32[16,1], index: 1, kind: input, shape index: {}]
  %s2 = inlined_call_operand.vmem [shape: s32[16,8], index: 2, kind: input, shape index: {}]
  %s3 = inlined_call_operand.vmem [shape: f32[32,96], index: 3, kind: input, shape index: {}]
  %s4 = inlined_call_operand.vmem [shape: f32[32,64], index: 4, kind: input, shape index: {}]
  %s5 = inlined_call_operand.vmem [shape: f32[1,64], index: 5, kind: input, shape index: {}]
  %s6 = inlined_call_operand.vmem [shape: f32[64,32], index: 6, kind: input, shape index: {}]
  %s7 = inlined_call_operand.vmem [shape: f32[1,32], index: 7, kind: input, shape index: {}]
  %s8 = inlined_call_operand.vmem [shape: f32[16,32], index: 8, kind: output, shape index: {}]
  %s9 = sld [smem:[#allocation0]]
  $region42: #{token_set_transformer_forward.4} parent=0
    _
  %s11 = ssub.s32 1, %s9
  %s12 = scalar_select 0, %s11, %s9
  // Predicated region
  $region2: #{token_set_transformer_forward.4} parent=0 // pred_check
    _
  $region3: #{token_set_transformer_forward.4} parent=0 // pred_check_branch
    %14 = sbr.rel (0) target = $region5
  $region4: #{token_set_transformer_forward.4} parent=0 // pred_region
    _
  $region5: #{token_set_transformer_forward.4} parent=0 // pred_fallthru
    _
  // Predicated region
  $region6: #{token_set_transformer_forward.4} parent=0 // pred_check
    _
  $region7: #{token_set_transformer_forward.4} parent=0 // pred_check_branch
    %16 = sbr.rel (0) target = $region9
  $region8: #{token_set_transformer_forward.4} parent=0 // pred_region
    _
  $region9: #{token_set_transformer_forward.4} parent=0 // pred_fallthru
    _
  // Predicated region
  $region10: #{token_set_transformer_forward.4} parent=0 // pred_check
    _
  $region11: #{token_set_transformer_forward.4} parent=0 // pred_check_branch
    %18 = sbr.rel (0) target = $region13
  $region12: #{token_set_transformer_forward.4} parent=0 // pred_region
    _
  $region13: #{token_set_transformer_forward.4} parent=0 // pred_fallthru
    _
  // Predicated region
  $region14: #{token_set_transformer_forward.4} parent=0 // pred_check
    _
  $region15: #{token_set_transformer_forward.4} parent=0 // pred_check_branch
    %20 = sbr.rel (0) target = $region17
  $region16: #{token_set_transformer_forward.4} parent=0 // pred_region
    _
  $region17: #{token_set_transformer_forward.4} parent=0 // pred_fallthru
    _
  // Predicated region
  $region18: #{token_set_transformer_forward.4} parent=0 // pred_check
    _
  $region19: #{token_set_transformer_forward.4} parent=0 // pred_check_branch
    %22 = sbr.rel (0) target = $region21
  $region20: #{token_set_transformer_forward.4} parent=0 // pred_region
    _
  $region21: #{token_set_transformer_forward.4} parent=0 // pred_fallthru
    _
  // Predicated region
  $region22: #{token_set_transformer_forward.4} parent=0 // pred_check
    _
  $region23: #{token_set_transformer_forward.4} parent=0 // pred_check_branch
    %24 = sbr.rel (0) target = $region25
  $region24: #{token_set_transformer_forward.4} parent=0 // pred_region
    _
  $region25: #{token_set_transformer_forward.4} parent=0 // pred_fallthru
    _
  // Predicated region
  $region26: #{token_set_transformer_forward.4} parent=0 // pred_check
    _
  $region27: #{token_set_transformer_forward.4} parent=0 // pred_check_branch
    %26 = sbr.rel (0) target = $region29
  $region28: #{token_set_transformer_forward.4} parent=0 // pred_region
    _
  $region29: #{token_set_transformer_forward.4} parent=0 // pred_fallthru
    _
  // Predicated region
  $region30: #{token_set_transformer_forward.4} parent=0 // pred_check
    _
  $region31: #{token_set_transformer_forward.4} parent=0 // pred_check_branch
    %28 = sbr.rel (0) target = $region33
  $region32: #{token_set_transformer_forward.4} parent=0 // pred_region
    _
  $region33: #{token_set_transformer_forward.4} parent=0 // pred_fallthru
    _
  %v29 = vld [vmem:[%s0] sm:$0xff]
  %v30 = vld [vmem:[%s0 + $0x8] sm:$0xff]
  %v31 = vld [vmem:[%s0 + $0x10] sm:$0xff]
  %v32 = vld [vmem:[%s0 + $0x18] sm:$0xff]
  %v33 = vld [vmem:[%s1] sm:$0xff]
  %v34 = vld [vmem:[%s1 + $0x8] sm:$0xff]
  %v35 = vld [vmem:[%s2] sm:$0xff]
  %v36 = vld [vmem:[%s2 + $0x8] sm:$0xff]
  %v37 = vlaneseq
  %v38 = vand.u32 %v37, 127
  %39 = vset.pattern.permute.xlu0 0
  %40 = vperm.xlu0 %39, %v33
  %v41 = vpop.permute.xlu0 %40
  %42 = vset.pattern.permute.xlu0 0
  %43 = vperm.xlu0 %42, %v34
  %v44 = vpop.permute.xlu0 %43
  %vm45 = vcmp.eq.s32.totalorder %v41, %v38
  %vm46 = vcmp.eq.s32.totalorder %v44, %v38
  %v47 = vsel %vm45, 1, 0
  %v48 = vsel %vm46, 1, 0
  %v49 = vcvt.s32.f32 %v47
  %v50 = vcvt.s32.f32 %v48
  %vm51 = vcmask 261120
  %v53 = vsel %vm51, %v49, 0
  %v56 = vsel %vm51, %v50, 0
  %58 = vmatprep.subr.mxu0 0.0
  %59 = vmatpush1.msra.mxu0 %v29
  %60 = vmatprep.subr.mxu0 0.0
  %61 = vmatpush1.msra.mxu0 %v30
  %62 = vmatprep.subr.mxu0 0.0
  %63 = vmatpush1.msra.mxu0 %v31
  %64 = vmatprep.subr.mxu0 0.0
  %65 = vmatpush1.msra.mxu0 %v32
  %66 = vmatprep.subr.mxu0 0.0
  %67 = vmatpush1.msra.mxu0 0.0
  %68 = vmatprep.subr.mxu0 0.0
  %69 = vmatpush1.msra.mxu0 0.0
  %70 = vmatprep.subr.mxu0 0.0
  %71 = vmatpush1.msra.mxu0 0.0
  %72 = vmatprep.subr.mxu0 0.0
  %73 = vmatpush1.msra.mxu0 0.0
  %74 = vmatprep.subr.mxu0 0.0
  %75 = vmatpush1.msra.mxu0 0.0
  %76 = vmatprep.subr.mxu0 0.0
  %77 = vmatpush1.msra.mxu0 0.0
  %78 = vmatprep.subr.mxu0 0.0
  %79 = vmatpush1.msra.mxu0 0.0
  %80 = vmatprep.subr.mxu0 0.0
  %81 = vmatpush1.msra.mxu0 0.0
  %82 = vmatprep.subr.mxu0 0.0
  %83 = vmatpush1.msra.mxu0 0.0
  %84 = vmatprep.subr.mxu0 0.0
  %85 = vmatpush1.msra.mxu0 0.0
  %86 = vmatprep.subr.mxu0 0.0
  %87 = vmatpush1.msra.mxu0 0.0
  %88 = vmatprep.subr.mxu0 0.0
  %89 = vmatpush1.msra.mxu0 0.0
  %90 = vmatprep.subr.mxu0 0.0
  %91 = vmatpush1.msra.mxu0 0.0
  %92 = vmatprep.subr.mxu0 0.0
  %93 = vmatpush1.msra.mxu0 0.0
  %94 = vmatprep.subr.mxu0 0.0
  %95 = vmatpush1.msra.mxu0 0.0
  %96 = vmatprep.subr.mxu0 0.0
  %97 = vmatpush1.msra.mxu0 0.0
  %98 = vmatprep.subr.mxu0 0.0
  %99 = vmatpush1.msra.mxu0 0.0
  %100 = vmatprep.subr.mxu0 0.0
  %101 = vmatpush1.msra.mxu0 0.0
  %102 = vmatprep.subr.mxu0 0.0
  %103 = vmatpush1.msra.mxu0 0.0
  %104 = vmatprep.subr.mxu0 0.0
  %105 = vmatpush1.msra.mxu0 0.0
  %106 = vmatprep.subr.mxu0 0.0
  %107 = vmatpush1.msra.mxu0 0.0
  %108 = vmatprep.subr.mxu0 0.0
  %109 = vmatpush1.msra.mxu0 0.0
  %110 = vmatprep.subr.mxu0 0.0
  %111 = vmatpush1.msra.mxu0 0.0
  %112 = vmatprep.subr.mxu0 0.0
  %113 = vmatpush1.msra.mxu0 0.0
  %114 = vmatprep.subr.mxu0 0.0
  %115 = vmatpush1.msra.mxu0 0.0
  %116 = vmatprep.subr.mxu0 0.0
  %117 = vmatpush1.msra.mxu0 0.0
  %118 = vmatprep.subr.mxu0 0.0
  %119 = vmatpush1.msra.mxu0 0.0
  %120 = vmatprep.subr.mxu0 0.0
  %121 = vmatpush1.msra.mxu0 0.0
  %122 = vmatprep.mubr.f32.mxu0 0.0
  %123 = vmatmul.mubr.f32.gmra.mrb[0].mxu0 %v53
  %v124 = vpop.f32.mrb[0].mxu0
  %v125 = vadd.f32 0.0, %v124
  %v126 = vpop.f32.mrb[0].mxu0
  %127 = vmatprep.mubr.f32.mxu0 0.0
  %128 = vmatmul.mubr.f32.gmra.mrb[0].mxu0 %v56
  %v129 = vpop.f32.mrb[0].mxu0
  %v130 = vadd.f32 0.0, %v129
  %v131 = vpop.f32.mrb[0].mxu0
  %132 = vdwg.mxu0
  %v133 = vsel %vm51, %v29, 0.0
  %v134 = vsel %vm51, %v30, 0.0
  %v135 = vadd.f32 %v133, %v134
  %v136 = vsel %vm51, %v31, 0.0
  %v137 = vadd.f32 %v135, %v136
  %v138 = vsel %vm51, %v32, 0.0
  %v139 = vadd.f32 %v137, %v138
  %v140 = vrot.slane %v139, 4
  %v141 = vadd.f32 %v139, %v140
  %v142 = vrot.slane %v141, 2
  %v143 = vadd.f32 %v141, %v142
  %v144 = vrot.slane %v143, 1
  %v145 = vadd.f32 %v143, %v144
  %v146 = vsel %vm51, %v125, 0.0
  %v147 = vsel %vm51, %v130, 0.0
  %v148 = vadd.f32 %v146, %v147
  %v149 = vrot.slane %v148, 4
  %v150 = vadd.f32 %v148, %v149
  %v151 = vrot.slane %v150, 2
  %v152 = vadd.f32 %v150, %v151
  %v153 = vrot.slane %v152, 1
  %v154 = vadd.f32 %v152, %v153
  %v155 = vadd.f32 %v145, %v154
  %v156 = vmul.f32 %v155, 0.020833334
  %v157 = vsub.f32 %v29, %v156
  %v158 = vsub.f32 %v30, %v156
  %v159 = vsub.f32 %v31, %v156
  %v160 = vsub.f32 %v32, %v156
  %v161 = vmul.f32 %v157, %v157
  %v162 = vmul.f32 %v158, %v158
  %v163 = vmul.f32 %v159, %v159
  %v164 = vmul.f32 %v160, %v160
  %v165 = vsel %vm51, %v161, 0.0
  %v166 = vsel %vm51, %v162, 0.0
  %v167 = vadd.f32 %v165, %v166
  %v168 = vsel %vm51, %v163, 0.0
  %v169 = vadd.f32 %v167, %v168
  %v170 = vsel %vm51, %v164, 0.0
  %v171 = vadd.f32 %v169, %v170
  %v172 = vrot.slane %v171, 4
  %v173 = vadd.f32 %v171, %v172
  %v174 = vrot.slane %v173, 2
  %v175 = vadd.f32 %v173, %v174
  %v176 = vrot.slane %v175, 1
  %v177 = vadd.f32 %v175, %v176
  %v178 = vsub.f32 %v125, %v156
  %v179 = vsub.f32 %v130, %v156
  %v180 = vmul.f32 %v178, %v178
  %v181 = vmul.f32 %v179, %v179
  %v182 = vsel %vm51, %v180, 0.0
  %v183 = vsel %vm51, %v181, 0.0
  %v184 = vadd.f32 %v182, %v183
  %v185 = vrot.slane %v184, 4
  %v186 = vadd.f32 %v184, %v185
  %v187 = vrot.slane %v186, 2
  %v188 = vadd.f32 %v186, %v187
  %v189 = vrot.slane %v188, 1
  %v190 = vadd.f32 %v188, %v189
  %v191 = vadd.f32 %v177, %v190
  %v192 = vmul.f32 %v191, 0.020833334
  %v193 = vadd.f32 %v192, 1e-05
  %v194 = vrsqrt.pop %v193
  %v195 = vmul.f32 %v157, %v194
  %v196 = vmul.f32 %v158, %v194
  %v197 = vmul.f32 %v159, %v194
  %v198 = vmul.f32 %v160, %v194
  %v199 = vmul.f32 %v178, %v194
  %v200 = vmul.f32 %v179, %v194
  %v201 = vld [vmem:[%s3] sm:$0xff]
  %v202 = vld [vmem:[%s3 + $0x8] sm:$0xff]
  %v203 = vld [vmem:[%s3 + $0x10] sm:$0xff]
  %v204 = vld [vmem:[%s3 + $0x18] sm:$0xff]
  %v206 = vsel %vm51, %v195, 0
  %v209 = vsel %vm51, %v196, 0
  %v212 = vsel %vm51, %v197, 0
  %v215 = vsel %vm51, %v198, 0
  %217 = vmatprep.subr.mxu0 0.0
  %218 = vmatpush1.msra.mxu0 %v201
  %219 = vmatprep.subr.mxu0 0.0
  %220 = vmatpush1.msra.mxu0 %v202
  %221 = vmatprep.subr.mxu0 0.0
  %222 = vmatpush1.msra.mxu0 %v203
  %223 = vmatprep.subr.mxu0 0.0
  %224 = vmatpush1.msra.mxu0 %v204
  %225 = vmatprep.subr.mxu0 0.0
  %226 = vmatpush1.msra.mxu0 0.0
  %227 = vmatprep.subr.mxu0 0.0
  %228 = vmatpush1.msra.mxu0 0.0
  %229 = vmatprep.subr.mxu0 0.0
  %230 = vmatpush1.msra.mxu0 0.0
  %231 = vmatprep.subr.mxu0 0.0
  %232 = vmatpush1.msra.mxu0 0.0
  %233 = vmatprep.subr.mxu0 0.0
  %234 = vmatpush1.msra.mxu0 0.0
  %235 = vmatprep.subr.mxu0 0.0
  %236 = vmatpush1.msra.mxu0 0.0
  %237 = vmatprep.subr.mxu0 0.0
  %238 = vmatpush1.msra.mxu0 0.0
  %239 = vmatprep.subr.mxu0 0.0
  %240 = vmatpush1.msra.mxu0 0.0
  %241 = vmatprep.subr.mxu0 0.0
  %242 = vmatpush1.msra.mxu0 0.0
  %243 = vmatprep.subr.mxu0 0.0
  %244 = vmatpush1.msra.mxu0 0.0
  %245 = vmatprep.subr.mxu0 0.0
  %246 = vmatpush1.msra.mxu0 0.0
  %247 = vmatprep.subr.mxu0 0.0
  %248 = vmatpush1.msra.mxu0 0.0
  %249 = vmatprep.subr.mxu0 0.0
  %250 = vmatpush1.msra.mxu0 0.0
  %251 = vmatprep.subr.mxu0 0.0
  %252 = vmatpush1.msra.mxu0 0.0
  %253 = vmatprep.subr.mxu0 0.0
  %254 = vmatpush1.msra.mxu0 0.0
  %255 = vmatprep.subr.mxu0 0.0
  %256 = vmatpush1.msra.mxu0 0.0
  %257 = vmatprep.subr.mxu0 0.0
  %258 = vmatpush1.msra.mxu0 0.0
  %259 = vmatprep.subr.mxu0 0.0
  %260 = vmatpush1.msra.mxu0 0.0
  %261 = vmatprep.subr.mxu0 0.0
  %262 = vmatpush1.msra.mxu0 0.0
  %263 = vmatprep.subr.mxu0 0.0
  %264 = vmatpush1.msra.mxu0 0.0
  %265 = vmatprep.subr.mxu0 0.0
  %266 = vmatpush1.msra.mxu0 0.0
  %267 = vmatprep.subr.mxu0 0.0
  %268 = vmatpush1.msra.mxu0 0.0
  %269 = vmatprep.subr.mxu0 0.0
  %270 = vmatpush1.msra.mxu0 0.0
  %271 = vmatprep.subr.mxu0 0.0
  %272 = vmatpush1.msra.mxu0 0.0
  %273 = vmatprep.subr.mxu0 0.0
  %274 = vmatpush1.msra.mxu0 0.0
  %275 = vmatprep.subr.mxu0 0.0
  %276 = vmatpush1.msra.mxu0 0.0
  %277 = vmatprep.subr.mxu0 0.0
  %278 = vmatpush1.msra.mxu0 0.0
  %279 = vmatprep.subr.mxu0 0.0
  %280 = vmatpush1.msra.mxu0 0.0
  %281 = vmatprep.mubr.f32.mxu0 0.0
  %282 = vmatmul.mubr.f32.gmra.mrb[0].mxu0 %v206
  %v283 = vpop.f32.mrb[0].mxu0
  %v284 = vadd.f32 0.0, %v283
  %v285 = vpop.f32.mrb[0].mxu0
  %286 = vmatprep.mubr.f32.mxu0 0.0
  %287 = vmatmul.mubr.f32.gmra.mrb[0].mxu0 %v209
  %v288 = vpop.f32.mrb[0].mxu0
  %v289 = vadd.f32 0.0, %v288
  %v290 = vpop.f32.mrb[0].mxu0
  %291 = vmatprep.mubr.f32.mxu0 0.0
  %292 = vmatmul.mubr.f32.gmra.mrb[0].mxu0 %v212
  %v293 = vpop.f32.mrb[0].mxu0
  %v294 = vadd.f32 0.0, %v293
  %v295 = vpop.f32.mrb[0].mxu0
  %296 = vmatprep.mubr.f32.mxu0 0.0
  %297 = vmatmul.mubr.f32.gmra.mrb[0].mxu0 %v215
  %v298 = vpop.f32.mrb[0].mxu0
  %v299 = vadd.f32 0.0, %v298
  %v300 = vpop.f32.mrb[0].mxu0
  %301 = vdwg.mxu0
  %v303 = vsel %vm51, %v199, 0
  %v306 = vsel %vm51, %v200, 0
  %308 = vmatprep.subr.mxu0 0.0
  %309 = vmatpush1.msra.mxu0 %v201
  %310 = vmatprep.subr.mxu0 0.0
  %311 = vmatpush1.msra.mxu0 %v202
  %312 = vmatprep.subr.mxu0 0.0
  %313 = vmatpush1.msra.mxu0 %v203
  %314 = vmatprep.subr.mxu0 0.0
  %315 = vmatpush1.msra.mxu0 %v204
  %316 = vmatprep.subr.mxu0 0.0
  %317 = vmatpush1.msra.mxu0 0.0
  %318 = vmatprep.subr.mxu0 0.0
  %319 = vmatpush1.msra.mxu0 0.0
  %320 = vmatprep.subr.mxu0 0.0
  %321 = vmatpush1.msra.mxu0 0.0
  %322 = vmatprep.subr.mxu0 0.0
  %323 = vmatpush1.msra.mxu0 0.0
  %324 = vmatprep.subr.mxu0 0.0
  %325 = vmatpush1.msra.mxu0 0.0
  %326 = vmatprep.subr.mxu0 0.0
  %327 = vmatpush1.msra.mxu0 0.0
  %328 = vmatprep.subr.mxu0 0.0
  %329 = vmatpush1.msra.mxu0 0.0
  %330 = vmatprep.subr.mxu0 0.0
  %331 = vmatpush1.msra.mxu0 0.0
  %332 = vmatprep.subr.mxu0 0.0
  %333 = vmatpush1.msra.mxu0 0.0
  %334 = vmatprep.subr.mxu0 0.0
  %335 = vmatpush1.msra.mxu0 0.0
  %336 = vmatprep.subr.mxu0 0.0
  %337 = vmatpush1.msra.mxu0 0.0
  %338 = vmatprep.subr.mxu0 0.0
  %339 = vmatpush1.msra.mxu0 0.0
  %340 = vmatprep.subr.mxu0 0.0
  %341 = vmatpush1.msra.mxu0 0.0
  %342 = vmatprep.subr.mxu0 0.0
  %343 = vmatpush1.msra.mxu0 0.0
  %344 = vmatprep.subr.mxu0 0.0
  %345 = vmatpush1.msra.mxu0 0.0
  %346 = vmatprep.subr.mxu0 0.0
  %347 = vmatpush1.msra.mxu0 0.0
  %348 = vmatprep.subr.mxu0 0.0
  %349 = vmatpush1.msra.mxu0 0.0
  %350 = vmatprep.subr.mxu0 0.0
  %351 = vmatpush1.msra.mxu0 0.0
  %352 = vmatprep.subr.mxu0 0.0
  %353 = vmatpush1.msra.mxu0 0.0
  %354 = vmatprep.subr.mxu0 0.0
  %355 = vmatpush1.msra.mxu0 0.0
  %356 = vmatprep.subr.mxu0 0.0
  %357 = vmatpush1.msra.mxu0 0.0
  %358 = vmatprep.subr.mxu0 0.0
  %359 = vmatpush1.msra.mxu0 0.0
  %360 = vmatprep.subr.mxu0 0.0
  %361 = vmatpush1.msra.mxu0 0.0
  %362 = vmatprep.subr.mxu0 0.0
  %363 = vmatpush1.msra.mxu0 0.0
  %364 = vmatprep.subr.mxu0 0.0
  %365 = vmatpush1.msra.mxu0 0.0
  %366 = vmatprep.subr.mxu0 0.0
  %367 = vmatpush1.msra.mxu0 0.0
  %368 = vmatprep.subr.mxu0 0.0
  %369 = vmatpush1.msra.mxu0 0.0
  %370 = vmatprep.subr.mxu0 0.0
  %371 = vmatpush1.msra.mxu0 0.0
  %372 = vmatprep.mubr.f32.mxu0 0.0
  %373 = vmatmul.mubr.f32.gmra.mrb[0].mxu0 %v303
  %v374 = vpop.f32.mrb[0].mxu0
  %v375 = vadd.f32 0.0, %v374
  %v376 = vpop.f32.mrb[0].mxu0
  %377 = vmatprep.mubr.f32.mxu0 0.0
  %378 = vmatmul.mubr.f32.gmra.mrb[0].mxu0 %v306
  %v379 = vpop.f32.mrb[0].mxu0
  %v380 = vadd.f32 0.0, %v379
  %v381 = vpop.f32.mrb[0].mxu0
  %382 = vdwg.mxu0
  %383 = vset.pattern.permute.xlu0 0
  %384 = vperm.xlu0 %383, %v35
  %v385 = vpop.permute.xlu0 %384
  %386 = vset.pattern.permute.xlu0 0
  %387 = vperm.xlu0 %386, %v36
  %v388 = vpop.permute.xlu0 %387
  %vm389 = vcmp.eq.s32.totalorder %v385, %v38
  %vm390 = vcmp.eq.s32.totalorder %v388, %v38
  %391 = vset.pattern.permute.xlu0 1
  %392 = vperm.xlu0 %391, %v35
  %v393 = vpop.permute.xlu0 %392
  %394 = vset.pattern.permute.xlu0 1
  %395 = vperm.xlu0 %394, %v36
  %v396 = vpop.permute.xlu0 %395
  %vm397 = vcmp.eq.s32.totalorder %v393, %v38
  %vm398 = vcmp.eq.s32.totalorder %v396, %v38
  %vm399 = vmor %vm389, %vm397
  %vm400 = vmor %vm390, %vm398
  %401 = vset.pattern.permute.xlu0 2
  %402 = vperm.xlu0 %401, %v35
  %v403 = vpop.permute.xlu0 %402
  %404 = vset.pattern.permute.xlu0 2
  %405 = vperm.xlu0 %404, %v36
  %v406 = vpop.permute.xlu0 %405
  %vm407 = vcmp.eq.s32.totalorder %v403, %v38
  %vm408 = vcmp.eq.s32.totalorder %v406, %v38
  %vm409 = vmor %vm399, %vm407
  %vm410 = vmor %vm400, %vm408
  %411 = vset.pattern.permute.xlu0 3
  %412 = vperm.xlu0 %411, %v35
  %v413 = vpop.permute.xlu0 %412
  %414 = vset.pattern.permute.xlu0 3
  %415 = vperm.xlu0 %414, %v36
  %v416 = vpop.permute.xlu0 %415
  %vm417 = vcmp.eq.s32.totalorder %v413, %v38
  %vm418 = vcmp.eq.s32.totalorder %v416, %v38
  %vm419 = vmor %vm409, %vm417
  %vm420 = vmor %vm410, %vm418
  %421 = vset.pattern.permute.xlu0 4
  %422 = vperm.xlu0 %421, %v35
  %v423 = vpop.permute.xlu0 %422
  %424 = vset.pattern.permute.xlu0 4
  %425 = vperm.xlu0 %424, %v36
  %v426 = vpop.permute.xlu0 %425
  %vm427 = vcmp.eq.s32.totalorder %v423, %v38
  %vm428 = vcmp.eq.s32.totalorder %v426, %v38
  %vm429 = vmor %vm419, %vm427
  %vm430 = vmor %vm420, %vm428
  %431 = vset.pattern.permute.xlu0 5
  %432 = vperm.xlu0 %431, %v35
  %v433 = vpop.permute.xlu0 %432
  %434 = vset.pattern.permute.xlu0 5
  %435 = vperm.xlu0 %434, %v36
  %v436 = vpop.permute.xlu0 %435
  %vm437 = vcmp.eq.s32.totalorder %v433, %v38
  %vm438 = vcmp.eq.s32.totalorder %v436, %v38
  %vm439 = vmor %vm429, %vm437
  %vm440 = vmor %vm430, %vm438
  %441 = vset.pattern.permute.xlu0 6
  %442 = vperm.xlu0 %441, %v35
  %v443 = vpop.permute.xlu0 %442
  %444 = vset.pattern.permute.xlu0 6
  %445 = vperm.xlu0 %444, %v36
  %v446 = vpop.permute.xlu0 %445
  %vm447 = vcmp.eq.s32.totalorder %v443, %v38
  %vm448 = vcmp.eq.s32.totalorder %v446, %v38
  %vm449 = vmor %vm439, %vm447
  %vm450 = vmor %vm440, %vm448
  %451 = vset.pattern.permute.xlu0 7
  %452 = vperm.xlu0 %451, %v35
  %v453 = vpop.permute.xlu0 %452
  %454 = vset.pattern.permute.xlu0 7
  %455 = vperm.xlu0 %454, %v36
  %v456 = vpop.permute.xlu0 %455
  %vm457 = vcmp.eq.s32.totalorder %v453, %v38
  %vm458 = vcmp.eq.s32.totalorder %v456, %v38
  %vm459 = vmor %vm449, %vm457
  %vm460 = vmor %vm450, %vm458
  %465 = vrot.lane.b32.xlu0 %v284, 96
  %v466 = vpop.permute.xlu0 %465
  %467 = vrot.lane.b32.xlu0 %v289, 96
  %v468 = vpop.permute.xlu0 %467
  %469 = vrot.lane.b32.xlu0 %v294, 96
  %v470 = vpop.permute.xlu0 %469
  %471 = vrot.lane.b32.xlu0 %v299, 96
  %v472 = vpop.permute.xlu0 %471
  %v474 = vsel %vm51, %v375, 0
  %v477 = vsel %vm51, %v380, 0
  %v479 = vsel %vm51, %v466, 0
  %v481 = vsel %vm51, %v468, 0
  %v483 = vsel %vm51, %v470, 0
  %v485 = vsel %vm51, %v472, 0
  %487 = vmatprep.subr.mxu0 0.0
  %488 = vmatpush1.xpose.msra.mxu0 %v479
  %489 = vmatprep.subr.mxu0 0.0
  %490 = vmatpush1.xpose.msra.mxu0 %v481
  %491 = vmatprep.subr.mxu0 0.0
  %492 = vmatpush1.xpose.msra.mxu0 %v483
  %493 = vmatprep.subr.mxu0 0.0
  %494 = vmatpush1.xpose.msra.mxu0 %v485
  %495 = vmatprep.subr.mxu0 0.0
  %496 = vmatpush1.xpose.msra.mxu0 0.0
  %497 = vmatprep.subr.mxu0 0.0
  %498 = vmatpush1.xpose.msra.mxu0 0.0
  %499 = vmatprep.subr.mxu0 0.0
  %500 = vmatpush1.xpose.msra.mxu0 0.0
  %501 = vmatprep.subr.mxu0 0.0
  %502 = vmatpush1.xpose.msra.mxu0 0.0
  %503 = vmatprep.subr.mxu0 0.0
  %504 = vmatpush1.xpose.msra.mxu0 0.0
  %505 = vmatprep.subr.mxu0 0.0
  %506 = vmatpush1.xpose.msra.mxu0 0.0
  %507 = vmatprep.subr.mxu0 0.0
  %508 = vmatpush1.xpose.msra.mxu0 0.0
  %509 = vmatprep.subr.mxu0 0.0
  %510 = vmatpush1.xpose.msra.mxu0 0.0
  %511 = vmatprep.subr.mxu0 0.0
  %512 = vmatpush1.xpose.msra.mxu0 0.0
  %513 = vmatprep.subr.mxu0 0.0
  %514 = vmatpush1.xpose.msra.mxu0 0.0
  %515 = vmatprep.subr.mxu0 0.0
  %516 = vmatpush1.xpose.msra.mxu0 0.0
  %517 = vmatprep.subr.mxu0 0.0
  %518 = vmatpush1.xpose.msra.mxu0 0.0
  %519 = vmatprep.subr.mxu0 0.0
  %520 = vmatpush1.xpose.msra.mxu0 0.0
  %521 = vmatprep.subr.mxu0 0.0
  %522 = vmatpush1.xpose.msra.mxu0 0.0
  %523 = vmatprep.subr.mxu0 0.0
  %524 = vmatpush1.xpose.msra.mxu0 0.0
  %525 = vmatprep.subr.mxu0 0.0
  %526 = vmatpush1.xpose.msra.mxu0 0.0
  %527 = vmatprep.subr.mxu0 0.0
  %528 = vmatpush1.xpose.msra.mxu0 0.0
  %529 = vmatprep.subr.mxu0 0.0
  %530 = vmatpush1.xpose.msra.mxu0 0.0
  %531 = vmatprep.subr.mxu0 0.0
  %532 = vmatpush1.xpose.msra.mxu0 0.0
  %533 = vmatprep.subr.mxu0 0.0
  %534 = vmatpush1.xpose.msra.mxu0 0.0
  %535 = vmatprep.subr.mxu0 0.0
  %536 = vmatpush1.xpose.msra.mxu0 0.0
  %537 = vmatprep.subr.mxu0 0.0
  %538 = vmatpush1.xpose.msra.mxu0 0.0
  %539 = vmatprep.subr.mxu0 0.0
  %540 = vmatpush1.xpose.msra.mxu0 0.0
  %541 = vmatprep.subr.mxu0 0.0
  %542 = vmatpush1.xpose.msra.mxu0 0.0
  %543 = vmatprep.subr.mxu0 0.0
  %544 = vmatpush1.xpose.msra.mxu0 0.0
  %545 = vmatprep.subr.mxu0 0.0
  %546 = vmatpush1.xpose.msra.mxu0 0.0
  %547 = vmatprep.subr.mxu0 0.0
  %548 = vmatpush1.xpose.msra.mxu0 0.0
  %549 = vmatprep.subr.mxu0 0.0
  %550 = vmatpush1.xpose.msra.mxu0 0.0
  %551 = vmatprep.mubr.f32.mxu0 0.0
  %552 = vmatmul.mubr.f32.gmra.mrb[0].mxu0 %v474
  %v553 = vpop.f32.mrb[0].mxu0
  %v554 = vadd.f32 0.0, %v553
  %v555 = vpop.f32.mrb[0].mxu0
  %556 = vmatprep.mubr.f32.mxu0 0.0
  %557 = vmatmul.mubr.f32.gmra.mrb[0].mxu0 %v477
  %v558 = vpop.f32.mrb[0].mxu0
  %v559 = vadd.f32 0.0, %v558
  %v560 = vpop.f32.mrb[0].mxu0
  %561 = vdwg.mxu0
  %v562 = vsel %vm459, %v554, -1e+30
  %v563 = vsel %vm460, %v559, -1e+30
  %v564 = vsel %vm51, %v562, -inf
  %565 = vmax.xlane.f32.xlu0 %v564
  %v566 = vpop.xlane.xlu0 %565
  %v567 = vsel %vm51, %v563, -inf
  %568 = vmax.xlane.f32.xlu0 %v567
  %v569 = vpop.xlane.xlu0 %568
  %v570 = vsub.f32 %v562, %v566
  %v571 = vsub.f32 %v563, %v569
  %v572 = vmul.f32 %v570, 1.442695
  %v573 = vpow.pop %v572
  %v574 = vmul.f32 %v571, 1.442695
  %v575 = vpow.pop %v574
  %v576 = vsel %vm51, %v573, 0.0
  %577 = vadd.xlane.f32.xlu0 %v576
  %v578 = vpop.xlane.xlu0 %577
  %v579 = vsel %vm51, %v575, 0.0
  %580 = vadd.xlane.f32.xlu0 %v579
  %v581 = vpop.xlane.xlu0 %580
  %v582 = vrcp.pop %v578
  %v583 = vrcp.pop %v581
  %v584 = vmul.f32 %v573, %v582
  %v585 = vmul.f32 %v575, %v583
  %586 = vrot.lane.b32.xlu0 %v284, 64
  %v587 = vpop.permute.xlu0 %586
  %588 = vrot.lane.b32.xlu0 %v289, 64
  %v589 = vpop.permute.xlu0 %588
  %590 = vrot.lane.b32.xlu0 %v294, 64
  %v591 = vpop.permute.xlu0 %590
  %592 = vrot.lane.b32.xlu0 %v299, 64
  %v593 = vpop.permute.xlu0 %592
  %v599 = vsel %vm51, %v584, 0
  %v602 = vsel %vm51, %v585, 0
  %604 = vmatprep.subr.mxu0 0.0
  %605 = vmatpush1.msra.mxu0 %v587
  %606 = vmatprep.subr.mxu0 0.0
  %607 = vmatpush1.msra.mxu0 %v589
  %608 = vmatprep.subr.mxu0 0.0
  %609 = vmatpush1.msra.mxu0 %v591
  %610 = vmatprep.subr.mxu0 0.0
  %611 = vmatpush1.msra.mxu0 %v593
  %612 = vmatprep.subr.mxu0 0.0
  %613 = vmatpush1.msra.mxu0 0.0
  %614 = vmatprep.subr.mxu0 0.0
  %615 = vmatpush1.msra.mxu0 0.0
  %616 = vmatprep.subr.mxu0 0.0
  %617 = vmatpush1.msra.mxu0 0.0
  %618 = vmatprep.subr.mxu0 0.0
  %619 = vmatpush1.msra.mxu0 0.0
  %620 = vmatprep.subr.mxu0 0.0
  %621 = vmatpush1.msra.mxu0 0.0
  %622 = vmatprep.subr.mxu0 0.0
  %623 = vmatpush1.msra.mxu0 0.0
  %624 = vmatprep.subr.mxu0 0.0
  %625 = vmatpush1.msra.mxu0 0.0
  %626 = vmatprep.subr.mxu0 0.0
  %627 = vmatpush1.msra.mxu0 0.0
  %628 = vmatprep.subr.mxu0 0.0
  %629 = vmatpush1.msra.mxu0 0.0
  %630 = vmatprep.subr.mxu0 0.0
  %631 = vmatpush1.msra.mxu0 0.0
  %632 = vmatprep.subr.mxu0 0.0
  %633 = vmatpush1.msra.mxu0 0.0
  %634 = vmatprep.subr.mxu0 0.0
  %635 = vmatpush1.msra.mxu0 0.0
  %636 = vmatprep.subr.mxu0 0.0
  %637 = vmatpush1.msra.mxu0 0.0
  %638 = vmatprep.subr.mxu0 0.0
  %639 = vmatpush1.msra.mxu0 0.0
  %640 = vmatprep.subr.mxu0 0.0
  %641 = vmatpush1.msra.mxu0 0.0
  %642 = vmatprep.subr.mxu0 0.0
  %643 = vmatpush1.msra.mxu0 0.0
  %644 = vmatprep.subr.mxu0 0.0
  %645 = vmatpush1.msra.mxu0 0.0
  %646 = vmatprep.subr.mxu0 0.0
  %647 = vmatpush1.msra.mxu0 0.0
  %648 = vmatprep.subr.mxu0 0.0
  %649 = vmatpush1.msra.mxu0 0.0
  %650 = vmatprep.subr.mxu0 0.0
  %651 = vmatpush1.msra.mxu0 0.0
  %652 = vmatprep.subr.mxu0 0.0
  %653 = vmatpush1.msra.mxu0 0.0
  %654 = vmatprep.subr.mxu0 0.0
  %655 = vmatpush1.msra.mxu0 0.0
  %656 = vmatprep.subr.mxu0 0.0
  %657 = vmatpush1.msra.mxu0 0.0
  %658 = vmatprep.subr.mxu0 0.0
  %659 = vmatpush1.msra.mxu0 0.0
  %660 = vmatprep.subr.mxu0 0.0
  %661 = vmatpush1.msra.mxu0 0.0
  %662 = vmatprep.subr.mxu0 0.0
  %663 = vmatpush1.msra.mxu0 0.0
  %664 = vmatprep.subr.mxu0 0.0
  %665 = vmatpush1.msra.mxu0 0.0
  %666 = vmatprep.subr.mxu0 0.0
  %667 = vmatpush1.msra.mxu0 0.0
  %668 = vmatprep.mubr.f32.mxu0 0.0
  %669 = vmatmul.mubr.f32.gmra.mrb[0].mxu0 %v599
  %v670 = vpop.f32.mrb[0].mxu0
  %v671 = vadd.f32 %v125, %v670
  %v672 = vpop.f32.mrb[0].mxu0
  %673 = vmatprep.mubr.f32.mxu0 0.0
  %674 = vmatmul.mubr.f32.gmra.mrb[0].mxu0 %v602
  %v675 = vpop.f32.mrb[0].mxu0
  %v676 = vadd.f32 %v130, %v675
  %v677 = vpop.f32.mrb[0].mxu0
  %678 = vdwg.mxu0
  %v679 = vsel %vm51, %v671, 0.0
  %v680 = vsel %vm51, %v676, 0.0
  %v681 = vadd.f32 %v679, %v680
  %v682 = vrot.slane %v681, 4
  %v683 = vadd.f32 %v681, %v682
  %v684 = vrot.slane %v683, 2
  %v685 = vadd.f32 %v683, %v684
  %v686 = vrot.slane %v685, 1
  %v687 = vadd.f32 %v685, %v686
  %v688 = vrcp.pop 16.0
  %v689 = vmul.f32 %v687, %v688
  %v690 = vsub.f32 %v671, %v689
  %v691 = vsub.f32 %v676, %v689
  %v692 = vmul.f32 %v690, %v690
  %v693 = vmul.f32 %v691, %v691
  %v694 = vsel %vm51, %v692, 0.0
  %v695 = vsel %vm51, %v693, 0.0
  %v696 = vadd.f32 %v694, %v695
  %v697 = vrot.slane %v696, 4
  %v698 = vadd.f32 %v696, %v697
  %v699 = vrot.slane %v698, 2
  %v700 = vadd.f32 %v698, %v699
  %v701 = vrot.slane %v700, 1
  %v702 = vadd.f32 %v700, %v701
  %v703 = vmul.f32 %v702, %v688
  %v704 = vadd.f32 %v703, 1e-05
  %v705 = vrsqrt.pop %v704
  %v706 = vmul.f32 %v690, %v705
  %v707 = vmul.f32 %v691, %v705
  %v708 = vld [vmem:[%s4] sm:$0xff]
  %v709 = vld [vmem:[%s4 + $0x8] sm:$0xff]
  %v710 = vld [vmem:[%s4 + $0x10] sm:$0xff]
  %v711 = vld [vmem:[%s4 + $0x18] sm:$0xff]
  %v712 = vld [vmem:[%s5] sm:$0x1]
  %v714 = vlaneseq
  %v715 = vshrl.u32 %v714, 7
  %v716 = vsub.s32 0, %v715
  %v717 = vrot.slane %v712, %v716
  %v720 = vsel %vm51, %v706, 0
  %v723 = vsel %vm51, %v707, 0
  %725 = vmatprep.subr.mxu0 0.0
  %726 = vmatpush1.msra.mxu0 %v708
  %727 = vmatprep.subr.mxu0 0.0
  %728 = vmatpush1.msra.mxu0 %v709
  %729 = vmatprep.subr.mxu0 0.0
  %730 = vmatpush1.msra.mxu0 %v710
  %731 = vmatprep.subr.mxu0 0.0
  %732 = vmatpush1.msra.mxu0 %v711
  %733 = vmatprep.subr.mxu0 0.0
  %734 = vmatpush1.msra.mxu0 0.0
  %735 = vmatprep.subr.mxu0 0.0
  %736 = vmatpush1.msra.mxu0 0.0
  %737 = vmatprep.subr.mxu0 0.0
  %738 = vmatpush1.msra.mxu0 0.0
  %739 = vmatprep.subr.mxu0 0.0
  %740 = vmatpush1.msra.mxu0 0.0
  %741 = vmatprep.subr.mxu0 0.0
  %742 = vmatpush1.msra.mxu0 0.0
  %743 = vmatprep.subr.mxu0 0.0
  %744 = vmatpush1.msra.mxu0 0.0
  %745 = vmatprep.subr.mxu0 0.0
  %746 = vmatpush1.msra.mxu0 0.0
  %747 = vmatprep.subr.mxu0 0.0
  %748 = vmatpush1.msra.mxu0 0.0
  %749 = vmatprep.subr.mxu0 0.0
  %750 = vmatpush1.msra.mxu0 0.0
  %751 = vmatprep.subr.mxu0 0.0
  %752 = vmatpush1.msra.mxu0 0.0
  %753 = vmatprep.subr.mxu0 0.0
  %754 = vmatpush1.msra.mxu0 0.0
  %755 = vmatprep.subr.mxu0 0.0
  %756 = vmatpush1.msra.mxu0 0.0
  %757 = vmatprep.subr.mxu0 0.0
  %758 = vmatpush1.msra.mxu0 0.0
  %759 = vmatprep.subr.mxu0 0.0
  %760 = vmatpush1.msra.mxu0 0.0
  %761 = vmatprep.subr.mxu0 0.0
  %762 = vmatpush1.msra.mxu0 0.0
  %763 = vmatprep.subr.mxu0 0.0
  %764 = vmatpush1.msra.mxu0 0.0
  %765 = vmatprep.subr.mxu0 0.0
  %766 = vmatpush1.msra.mxu0 0.0
  %767 = vmatprep.subr.mxu0 0.0
  %768 = vmatpush1.msra.mxu0 0.0
  %769 = vmatprep.subr.mxu0 0.0
  %770 = vmatpush1.msra.mxu0 0.0
  %771 = vmatprep.subr.mxu0 0.0
  %772 = vmatpush1.msra.mxu0 0.0
  %773 = vmatprep.subr.mxu0 0.0
  %774 = vmatpush1.msra.mxu0 0.0
  %775 = vmatprep.subr.mxu0 0.0
  %776 = vmatpush1.msra.mxu0 0.0
  %777 = vmatprep.subr.mxu0 0.0
  %778 = vmatpush1.msra.mxu0 0.0
  %779 = vmatprep.subr.mxu0 0.0
  %780 = vmatpush1.msra.mxu0 0.0
  %781 = vmatprep.subr.mxu0 0.0
  %782 = vmatpush1.msra.mxu0 0.0
  %783 = vmatprep.subr.mxu0 0.0
  %784 = vmatpush1.msra.mxu0 0.0
  %785 = vmatprep.subr.mxu0 0.0
  %786 = vmatpush1.msra.mxu0 0.0
  %787 = vmatprep.subr.mxu0 0.0
  %788 = vmatpush1.msra.mxu0 0.0
  %789 = vmatprep.mubr.f32.mxu0 0.0
  %790 = vmatmul.mubr.f32.gmra.mrb[0].mxu0 %v720
  %v791 = vpop.f32.mrb[0].mxu0
  %v792 = vadd.f32 %v717, %v791
  %v793 = vpop.f32.mrb[0].mxu0
  %794 = vmatprep.mubr.f32.mxu0 0.0
  %795 = vmatmul.mubr.f32.gmra.mrb[0].mxu0 %v723
  %v796 = vpop.f32.mrb[0].mxu0
  %v797 = vadd.f32 %v717, %v796
  %v798 = vpop.f32.mrb[0].mxu0
  %799 = vdwg.mxu0
  %v800 = vmax.f32 %v792, 0.0
  %v801 = vmax.f32 %v797, 0.0
  %v802 = vld [vmem:[%s6] sm:$0xff]
  %v803 = vld [vmem:[%s6 + $0x8] sm:$0xff]
  %v804 = vld [vmem:[%s6 + $0x10] sm:$0xff]
  %v805 = vld [vmem:[%s6 + $0x18] sm:$0xff]
  %v806 = vld [vmem:[%s6 + $0x20] sm:$0xff]
  %v807 = vld [vmem:[%s6 + $0x28] sm:$0xff]
  %v808 = vld [vmem:[%s6 + $0x30] sm:$0xff]
  %v809 = vld [vmem:[%s6 + $0x38] sm:$0xff]
  %v810 = vld [vmem:[%s7] sm:$0x1]
  %v812 = vlaneseq
  %v813 = vshrl.u32 %v812, 7
  %v814 = vsub.s32 0, %v813
  %v815 = vrot.slane %v810, %v814
  %vm817 = vcmask 523264
  %v819 = vsel %vm817, %v800, 0
  %v822 = vsel %vm817, %v801, 0
  %824 = vmatprep.subr.mxu0 0.0
  %825 = vmatpush1.msra.mxu0 %v802
  %826 = vmatprep.subr.mxu0 0.0
  %827 = vmatpush1.msra.mxu0 %v803
  %828 = vmatprep.subr.mxu0 0.0
  %829 = vmatpush1.msra.mxu0 %v804
  %830 = vmatprep.subr.mxu0 0.0
  %831 = vmatpush1.msra.mxu0 %v805
  %832 = vmatprep.subr.mxu0 0.0
  %833 = vmatpush1.msra.mxu0 %v806
  %834 = vmatprep.subr.mxu0 0.0
  %835 = vmatpush1.msra.mxu0 %v807
  %836 = vmatprep.subr.mxu0 0.0
  %837 = vmatpush1.msra.mxu0 %v808
  %838 = vmatprep.subr.mxu0 0.0
  %839 = vmatpush1.msra.mxu0 %v809
  %840 = vmatprep.subr.mxu0 0.0
  %841 = vmatpush1.msra.mxu0 0.0
  %842 = vmatprep.subr.mxu0 0.0
  %843 = vmatpush1.msra.mxu0 0.0
  %844 = vmatprep.subr.mxu0 0.0
  %845 = vmatpush1.msra.mxu0 0.0
  %846 = vmatprep.subr.mxu0 0.0
  %847 = vmatpush1.msra.mxu0 0.0
  %848 = vmatprep.subr.mxu0 0.0
  %849 = vmatpush1.msra.mxu0 0.0
  %850 = vmatprep.subr.mxu0 0.0
  %851 = vmatpush1.msra.mxu0 0.0
  %852 = vmatprep.subr.mxu0 0.0
  %853 = vmatpush1.msra.mxu0 0.0
  %854 = vmatprep.subr.mxu0 0.0
  %855 = vmatpush1.msra.mxu0 0.0
  %856 = vmatprep.subr.mxu0 0.0
  %857 = vmatpush1.msra.mxu0 0.0
  %858 = vmatprep.subr.mxu0 0.0
  %859 = vmatpush1.msra.mxu0 0.0
  %860 = vmatprep.subr.mxu0 0.0
  %861 = vmatpush1.msra.mxu0 0.0
  %862 = vmatprep.subr.mxu0 0.0
  %863 = vmatpush1.msra.mxu0 0.0
  %864 = vmatprep.subr.mxu0 0.0
  %865 = vmatpush1.msra.mxu0 0.0
  %866 = vmatprep.subr.mxu0 0.0
  %867 = vmatpush1.msra.mxu0 0.0
  %868 = vmatprep.subr.mxu0 0.0
  %869 = vmatpush1.msra.mxu0 0.0
  %870 = vmatprep.subr.mxu0 0.0
  %871 = vmatpush1.msra.mxu0 0.0
  %872 = vmatprep.subr.mxu0 0.0
  %873 = vmatpush1.msra.mxu0 0.0
  %874 = vmatprep.subr.mxu0 0.0
  %875 = vmatpush1.msra.mxu0 0.0
  %876 = vmatprep.subr.mxu0 0.0
  %877 = vmatpush1.msra.mxu0 0.0
  %878 = vmatprep.subr.mxu0 0.0
  %879 = vmatpush1.msra.mxu0 0.0
  %880 = vmatprep.subr.mxu0 0.0
  %881 = vmatpush1.msra.mxu0 0.0
  %882 = vmatprep.subr.mxu0 0.0
  %883 = vmatpush1.msra.mxu0 0.0
  %884 = vmatprep.subr.mxu0 0.0
  %885 = vmatpush1.msra.mxu0 0.0
  %886 = vmatprep.subr.mxu0 0.0
  %887 = vmatpush1.msra.mxu0 0.0
  %888 = vmatprep.mubr.f32.mxu0 0.0
  %889 = vmatmul.mubr.f32.gmra.mrb[0].mxu0 %v819
  %v890 = vpop.f32.mrb[0].mxu0
  %v891 = vadd.f32 %v815, %v890
  %v892 = vpop.f32.mrb[0].mxu0
  %893 = vmatprep.mubr.f32.mxu0 0.0
  %894 = vmatmul.mubr.f32.gmra.mrb[0].mxu0 %v822
  %v895 = vpop.f32.mrb[0].mxu0
  %v896 = vadd.f32 %v815, %v895
  %v897 = vpop.f32.mrb[0].mxu0
  %898 = vdwg.mxu0
  %v899 = vadd.f32 %v891, %v671
  %v900 = vadd.f32 %v896, %v676
  %901 = vst.msk [vmem:[%s8] sm:$0xff] %vm51, %v899
  %902 = vst.msk [vmem:[%s8 + $0x8] sm:$0xff] %vm51, %v900
  // Predicated region
  $region34: #{token_set_transformer_forward.4} parent=0 // pred_check
    _
  $region35: #{token_set_transformer_forward.4} parent=0 // pred_check_branch
    %904 = sbr.rel (0) target = $region37
  $region36: #{token_set_transformer_forward.4} parent=0 // pred_region
    _
  $region37: #{token_set_transformer_forward.4} parent=0 // pred_fallthru
    _
  // Predicated region
  $region38: #{token_set_transformer_forward.4} parent=0 // pred_check
    _
  $region39: #{token_set_transformer_forward.4} parent=0 // pred_check_branch
    %906 = sbr.rel (0) target = $region41
  $region40: #{token_set_transformer_forward.4} parent=0 // pred_region
    _
  $region41: #{token_set_transformer_forward.4} parent=0 // pred_fallthru
    _

</llo_original>
